<compile_context>
chip_gen: v5e
topology: v5e:2x2
jax: 0.10.0
libtpu: 0.0.40
codegen_flags: <defaults>
</compile_context>

<pallas_src>
import functools
import math

import jax
import jax.numpy as jnp
from jax.experimental import pallas as pl
from jax.experimental.pallas import tpu as pltpu


def _sigmoid(x):
    # Stable sigmoid via a single tanh (one EUP transcendental per element).
    return 0.5 * (jnp.tanh(0.5 * x) + 1.0)


def _convlstm_kernel(p_ref, w_ref, b_ref, c_ref, h_out_ref, c_out_ref, *, hidden_dim):
    """Fused (im2col-GEMM conv) + LSTM gate update for one row-block.

    p_ref : (TM, Kp)        im2col patches of cat([x, h_cur]) (zero-padded K)
    w_ref : (Kp, 4*Chid)    conv weight, gate-major last axis (i, f, o, g)
    b_ref : (1, 4*Chid)     conv bias
    c_ref : (TM, Chid)      current cell state
    """
    C = hidden_dim

    # Conv as a GEMM on the MXU; accumulate in f32.
    cc = jnp.dot(p_ref[...].astype(jnp.float32), w_ref[...].astype(jnp.float32),
                 preferred_element_type=jnp.float32)
    cc = cc + b_ref[...].astype(jnp.float32)              # (1, 4C) broadcasts to (TM, 4C)

    i = _sigmoid(cc[:, 0 * C:1 * C])
    f = _sigmoid(cc[:, 1 * C:2 * C])
    o = _sigmoid(cc[:, 2 * C:3 * C])
    g = jnp.tanh(cc[:, 3 * C:4 * C])

    c_next = f * c_ref[...].astype(jnp.float32) + i * g
    h_next = o * jnp.tanh(c_next)

    h_out_ref[...] = h_next.astype(h_out_ref.dtype)
    c_out_ref[...] = c_next.astype(c_out_ref.dtype)


def _pick_block_rows(rows, target=256):
    """Largest multiple-of-8 divisor of `rows` that is <= target (else full rows)."""
    best = None
    tm = 8
    while tm <= min(rows, target):
        if rows % tm == 0:
            best = tm
        tm += 8
    return best if best is not None else rows


def conv_lstm_cell(input_tensor, cur_state, weight, bias=None, *, kernel_size=(3, 3)):
    """ConvLSTMCell.forward.

    input_tensor : (B, Cin, H, W)
    cur_state    : (h_cur, c_cur), each (B, Chid, H, W)
    weight       : (4*Chid, Cin+Chid, kH, kW)   (torch Conv2d layout)
    bias         : (4*Chid,) or None
    returns      : (h_next, c_next), each (B, Chid, H, W)
    """
    h_cur, c_cur = cur_state
    B, Cin, H, W = input_tensor.shape
    Chid = h_cur.shape[1]
    kH, kW = kernel_size
    ph, pw = kH // 2, kW // 2
    Ctot = Cin + Chid
    K = kH * kW * Ctot
    dtype = input_tensor.dtype

    # ---- wrapper-side layout plumbing (pure data movement, no FLOPs) ----
    x_n = jnp.transpose(input_tensor, (0, 2, 3, 1))
    h_n = jnp.transpose(h_cur, (0, 2, 3, 1))
    c_n = jnp.transpose(c_cur, (0, 2, 3, 1))
    combined = jnp.concatenate([x_n, h_n], axis=-1)                    # (B, H, W, Ctot)
    comb_pad = jnp.pad(combined, ((0, 0), (ph, ph), (pw, pw), (0, 0)))

    # im2col: last-dim index = (kh*kW + kw)*Ctot + ic
    patches = jnp.concatenate(
        [comb_pad[:, kh:kh + H, kw:kw + W, :] for kh in range(kH) for kw in range(kW)],
        axis=-1)                                                       # (B, H, W, K)
    rows = B * H * W
    patches = patches.reshape(rows, K)
    c_flat = c_n.reshape(rows, Chid)

    # Conv weight -> (K, 4*Chid), matching the patch ordering (kh, kw, ic).
    w2 = jnp.transpose(weight, (2, 3, 1, 0)).reshape(K, 4 * Chid)
    if bias is None:
        b2 = jnp.zeros((1, 4 * Chid), dtype=weight.dtype)
    else:
        b2 = bias.reshape(1, 4 * Chid)

    # Zero-pad the contraction dim to a multiple of 128 (lane-dense, aligned MXU tiles).
    K_pad = ((K + 127) // 128) * 128
    if K_pad != K:
        patches = jnp.pad(patches, ((0, 0), (0, K_pad - K)))
        w2 = jnp.pad(w2, ((0, K_pad - K), (0, 0)))

    tm = _pick_block_rows(rows)
    grid = (rows // tm,)

    # VMEM budget: double-buffered row blocks + resident weight/bias, with
    # headroom; capped below v7x's 64 MiB physical VMEM.
    block_bytes = 4 * (2 * tm * K_pad + 2 * tm * Chid + 4 * tm * Chid
                       + K_pad * 4 * Chid + 4 * Chid)
    vmem_limit = int(min(max(2 * block_bytes, 8 << 20), 48 << 20))

    kernel = functools.partial(_convlstm_kernel, hidden_dim=Chid)

    h_flat, cnext_flat = pl.pallas_call(
        kernel,
        out_shape=(jax.ShapeDtypeStruct((rows, Chid), dtype),
                   jax.ShapeDtypeStruct((rows, Chid), dtype)),
        grid_spec=pltpu.PrefetchScalarGridSpec(
            num_scalar_prefetch=0,
            grid=grid,
            in_specs=[
                pl.BlockSpec((tm, K_pad), lambda i: (i, 0)),
                pl.BlockSpec((K_pad, 4 * Chid), lambda i: (0, 0)),
                pl.BlockSpec((1, 4 * Chid), lambda i: (0, 0)),
                pl.BlockSpec((tm, Chid), lambda i: (i, 0)),
            ],
            out_specs=[
                pl.BlockSpec((tm, Chid), lambda i: (i, 0)),
                pl.BlockSpec((tm, Chid), lambda i: (i, 0)),
            ],
        ),
        compiler_params=pltpu.CompilerParams(
            dimension_semantics=("parallel",),
            vmem_limit_bytes=vmem_limit,
        ),
    )(patches, w2, b2, c_flat)

    h_next = jnp.transpose(h_flat.reshape(B, H, W, Chid), (0, 3, 1, 2))
    c_next = jnp.transpose(cnext_flat.reshape(B, H, W, Chid), (0, 3, 1, 2))
    return h_next, c_next


def init_hidden(batch_size, hidden_dim, image_size, dtype=jnp.float32):
    H, W = image_size
    z = jnp.zeros((batch_size, hidden_dim, H, W), dtype=dtype)
    return z, z


def _reference(x, h, c, weight, bias, kernel_size):
    """Pure-JAX replica of the PyTorch ConvLSTMCell.forward."""
    kH, kW = kernel_size
    ph, pw = kH // 2, kW // 2
    combined = jnp.concatenate([x, h], axis=1)
    cc = jax.lax.conv_general_dilated(
        combined, weight, window_strides=(1, 1),
        padding=((ph, ph), (pw, pw)),
        dimension_numbers=('NCHW', 'OIHW', 'NCHW'),
        precision=jax.lax.Precision.HIGHEST)
    if bias is not None:
        cc = cc + bias[None, :, None, None]
    cc_i, cc_f, cc_o, cc_g = jnp.split(cc, 4, axis=1)
    i = jax.nn.sigmoid(cc_i)
    f = jax.nn.sigmoid(cc_f)
    o = jax.nn.sigmoid(cc_o)
    g = jnp.tanh(cc_g)
    c_next = f * c + i * g
    h_next = o * jnp.tanh(c_next)
    return h_next, c_next


if __name__ == "__main__":
    key = jax.random.PRNGKey(0)
    B, Cin, Chid, H, W = 2, 4, 32, 16, 16
    kH, kW = 3, 3

    k1, k2, k3, k4, k5 = jax.random.split(key, 5)
    x = jax.random.normal(k1, (B, Cin, H, W), dtype=jnp.float32)
    h = jax.random.normal(k2, (B, Chid, H, W), dtype=jnp.float32)
    c = jax.random.normal(k3, (B, Chid, H, W), dtype=jnp.float32)
    fan_in = (Cin + Chid) * kH * kW
    weight = jax.random.normal(k4, (4 * Chid, Cin + Chid, kH, kW),
                               dtype=jnp.float32) / math.sqrt(fan_in)
    bias = 0.1 * jax.random.normal(k5, (4 * Chid,), dtype=jnp.float32)

    h_next, c_next = conv_lstm_cell(x, (h, c), weight, bias, kernel_size=(kH, kW))
    h_next, c_next = jax.block_until_ready((h_next, c_next))

    h_ref, c_ref = _reference(x, h, c, weight, bias, (kH, kW))
    assert h_next.shape == (B, Chid, H, W) and c_next.shape == (B, Chid, H, W)
    # Tolerance accounts for MXU default-precision f32 matmul vs HIGHEST-precision ref.
    assert jnp.allclose(h_next, h_ref, atol=2e-2, rtol=2e-2), "h_next mismatch vs reference"
    assert jnp.allclose(c_next, c_ref, atol=2e-2, rtol=2e-2), "c_next mismatch vs reference"

    print("KERNEL_OK")
</pallas_src>

<mosaic_0001>
module attributes {stable_mosaic.version = 11 : i64} {
  func.func @_convlstm_kernel(%arg0: i32, %arg1: memref<256x384xf32, #tpu.memory_space<vmem>>, %arg2: memref<384x128xf32, #tpu.memory_space<vmem>>, %arg3: memref<1x128xf32, #tpu.memory_space<vmem>>, %arg4: memref<256x32xf32, #tpu.memory_space<vmem>>, %arg5: memref<256x32xf32, #tpu.memory_space<vmem>>, %arg6: memref<256x32xf32, #tpu.memory_space<vmem>>) attributes {dimension_semantics = [#tpu.dimension_semantics<parallel>], iteration_bounds = array<i64: 2>, scalar_prefetch = 0 : i64, scratch_operands = 0 : i64, tpu.core_type = #tpu.core_type<tc>, window_params = [{transform_indices = @transform_0, window_bounds = array<i64: 256, 384>}, {pipeline_mode = #tpu.pipeline_mode<synchronous>, transform_indices = @transform_1, window_bounds = array<i64: 384, 128>}, {pipeline_mode = #tpu.pipeline_mode<synchronous>, transform_indices = @transform_2, window_bounds = array<i64: 1, 128>}, {transform_indices = @transform_3, window_bounds = array<i64: 256, 32>}, {transform_indices = @transform_4, window_bounds = array<i64: 256, 32>}, {transform_indices = @transform_5, window_bounds = array<i64: 256, 32>}]} {
    %c0 = arith.constant 0 : index
    %c0_0 = arith.constant 0 : index
    %0 = vector.load %arg1[%c0, %c0_0] : memref<256x384xf32, #tpu.memory_space<vmem>>, vector<256x384xf32>
    %c0_1 = arith.constant 0 : index
    %c0_2 = arith.constant 0 : index
    %1 = vector.load %arg2[%c0_1, %c0_2] : memref<384x128xf32, #tpu.memory_space<vmem>>, vector<384x128xf32>
    %cst = arith.constant dense<0.000000e+00> : vector<256x128xf32>
    %2 = tpu.matmul %0, %1, %cst {dimension_numbers = #tpu.dot_dimension_numbers<[1], [0], [0], [1], [0, 0, 1, 1], [], []>} : vector<256x384xf32>, vector<384x128xf32>, vector<256x128xf32> -> vector<256x128xf32>
    %c0_3 = arith.constant 0 : index
    %c0_4 = arith.constant 0 : index
    %3 = vector.load %arg3[%c0_3, %c0_4] : memref<1x128xf32, #tpu.memory_space<vmem>>, vector<1x128xf32>
    %4 = vector.broadcast %3 : vector<1x128xf32> to vector<256x128xf32>
    %5 = arith.addf %2, %4 : vector<256x128xf32>
    %6 = vector.extract_strided_slice %5 {offsets = [0, 0], sizes = [256, 32], strides = [1, 1]} : vector<256x128xf32> to vector<256x32xf32>
    %cst_5 = arith.constant 5.000000e-01 : f32
    %7 = vector.broadcast %cst_5 : f32 to vector<256x32xf32>
    %8 = arith.mulf %7, %6 : vector<256x32xf32>
    %9 = math.tanh %8 : vector<256x32xf32>
    %cst_6 = arith.constant 1.000000e+00 : f32
    %10 = vector.broadcast %cst_6 : f32 to vector<256x32xf32>
    %11 = arith.addf %9, %10 : vector<256x32xf32>
    %cst_7 = arith.constant 5.000000e-01 : f32
    %12 = vector.broadcast %cst_7 : f32 to vector<256x32xf32>
    %13 = arith.mulf %12, %11 : vector<256x32xf32>
    %14 = vector.extract_strided_slice %5 {offsets = [0, 32], sizes = [256, 32], strides = [1, 1]} : vector<256x128xf32> to vector<256x32xf32>
    %cst_8 = arith.constant 5.000000e-01 : f32
    %15 = vector.broadcast %cst_8 : f32 to vector<256x32xf32>
    %16 = arith.mulf %15, %14 : vector<256x32xf32>
    %17 = math.tanh %16 : vector<256x32xf32>
    %cst_9 = arith.constant 1.000000e+00 : f32
    %18 = vector.broadcast %cst_9 : f32 to vector<256x32xf32>
    %19 = arith.addf %17, %18 : vector<256x32xf32>
    %cst_10 = arith.constant 5.000000e-01 : f32
    %20 = vector.broadcast %cst_10 : f32 to vector<256x32xf32>
    %21 = arith.mulf %20, %19 : vector<256x32xf32>
    %22 = vector.extract_strided_slice %5 {offsets = [0, 64], sizes = [256, 32], strides = [1, 1]} : vector<256x128xf32> to vector<256x32xf32>
    %cst_11 = arith.constant 5.000000e-01 : f32
    %23 = vector.broadcast %cst_11 : f32 to vector<256x32xf32>
    %24 = arith.mulf %23, %22 : vector<256x32xf32>
    %25 = math.tanh %24 : vector<256x32xf32>
    %cst_12 = arith.constant 1.000000e+00 : f32
    %26 = vector.broadcast %cst_12 : f32 to vector<256x32xf32>
    %27 = arith.addf %25, %26 : vector<256x32xf32>
    %cst_13 = arith.constant 5.000000e-01 : f32
    %28 = vector.broadcast %cst_13 : f32 to vector<256x32xf32>
    %29 = arith.mulf %28, %27 : vector<256x32xf32>
    %30 = vector.extract_strided_slice %5 {offsets = [0, 96], sizes = [256, 32], strides = [1, 1]} : vector<256x128xf32> to vector<256x32xf32>
    %31 = math.tanh %30 : vector<256x32xf32>
    %c0_14 = arith.constant 0 : index
    %c0_15 = arith.constant 0 : index
    %32 = vector.load %arg4[%c0_14, %c0_15] : memref<256x32xf32, #tpu.memory_space<vmem>>, vector<256x32xf32>
    %33 = arith.mulf %21, %32 : vector<256x32xf32>
    %34 = arith.mulf %13, %31 : vector<256x32xf32>
    %35 = arith.addf %33, %34 : vector<256x32xf32>
    %36 = math.tanh %35 : vector<256x32xf32>
    %37 = arith.mulf %29, %36 : vector<256x32xf32>
    %c0_16 = arith.constant 0 : index
    %c0_17 = arith.constant 0 : index
    %38 = vector.load %arg5[%c0_16, %c0_17] : memref<256x32xf32, #tpu.memory_space<vmem>>, vector<256x32xf32>
    tpu.vector_store %arg5[%c0_16, %c0_17], %37 {strides = array<i32>} : memref<256x32xf32, #tpu.memory_space<vmem>>, vector<256x32xf32>,
    %c0_18 = arith.constant 0 : index
    %c0_19 = arith.constant 0 : index
    %39 = vector.load %arg6[%c0_18, %c0_19] : memref<256x32xf32, #tpu.memory_space<vmem>>, vector<256x32xf32>
    tpu.vector_store %arg6[%c0_18, %c0_19], %35 {strides = array<i32>} : memref<256x32xf32, #tpu.memory_space<vmem>>, vector<256x32xf32>,
    return
  }
  func.func @transform_0(%arg0: i32) -> (i32, i32) {
    %c0_i32 = arith.constant 0 : i32
    %c0_i32_0 = arith.constant 0 : i32
    return %arg0, %c0_i32 : i32, i32
  }
  func.func @transform_1(%arg0: i32) -> (i32, i32) {
    %c0_i32 = arith.constant 0 : i32
    %c0_i32_0 = arith.constant 0 : i32
    %c0_i32_1 = arith.constant 0 : i32
    return %c0_i32, %c0_i32_0 : i32, i32
  }
  func.func @transform_2(%arg0: i32) -> (i32, i32) {
    %c0_i32 = arith.constant 0 : i32
    %c0_i32_0 = arith.constant 0 : i32
    %c0_i32_1 = arith.constant 0 : i32
    return %c0_i32, %c0_i32_0 : i32, i32
  }
  func.func @transform_3(%arg0: i32) -> (i32, i32) {
    %c0_i32 = arith.constant 0 : i32
    %c0_i32_0 = arith.constant 0 : i32
    return %arg0, %c0_i32 : i32, i32
  }
  func.func @transform_4(%arg0: i32) -> (i32, i32) {
    %c0_i32 = arith.constant 0 : i32
    %c0_i32_0 = arith.constant 0 : i32
    return %arg0, %c0_i32 : i32, i32
  }
  func.func @transform_5(%arg0: i32) -> (i32, i32) {
    %c0_i32 = arith.constant 0 : i32
    %c0_i32_0 = arith.constant 0 : i32
    return %arg0, %c0_i32 : i32, i32
  }
}

</mosaic_0001>

<llo_original>
// kernel: tpu_custom_call.1
$region0: #{tpu_custom_call.1}
  #allocation0 [shape = 'u32[]', space=smem, size = 0x4, offset = 0x4, fixed_abs, tag = 'smem constant byte address 0x4 - core index']
  #allocation1 [shape = 'u32[72,128]{1,0:T(1,128)}', space=vmem, size = 0x9000, scoped, tag = 'internal scratch']
  %s0 = inlined_call_operand.hbm [shape: f32[512,384], index: 0, kind: input, shape index: {}]
  %s1 = inlined_call_operand.vmem [shape: f32[384,128], index: 1, kind: input, shape index: {}]
  %s2 = inlined_call_operand.vmem [shape: f32[1,128], index: 2, kind: input, shape index: {}]
  %s3 = inlined_call_operand.vmem [shape: f32[512,32], index: 3, kind: input, shape index: {}]
  %s4 = inlined_call_operand.vmem [shape: f32[512,32], index: 4, kind: output, shape index: {0}]
  %s5 = inlined_call_operand.vmem [shape: f32[512,32], index: 5, kind: output, shape index: {1}]
  %6 = xla_tuple %s4, %s5
  %s7 = sld [smem:[#allocation0]]
  $region61: #{tpu_custom_call.1} parent=0
    _
  %s9 = ssub.s32 1, %s7
  %s10 = scalar_select 0, %s9, %s7
  $region1: #{tpu_custom_call.1} parent=0
    #allocation2 [shape = 'u8[786432]{0}', space=vmem, size = 0xc0000, scoped, tag = 'input window, operand 0']
    #allocation3 [shape = 's32[2]{0}', space=sflag, size = 0x8, scoped, tag = 'scoped memory for tpu_custom_call.1']
    %11 = vsyncpa [#allocation3], 0
    %s12 = scalar_lea.sflag [#allocation3], 1
    %13 = vsyncpa %s12, 0
    loop: start=0, step=1, limit=4
    $region2: #{tpu_custom_call.1} parent=1 // loop_pre_header
      _
    $region3: #{tpu_custom_call.1} parent=1 // loop_header
      %s15 = sphi 0, %s19
      %p16 = scmp.ge.s32.totalorder %s15, 4
      %s25 = sphi 0, %s27
      %s28 = sphi 0, %s25
      %s29 = sphi 0, %s28
      %s45 = sphi 0, %s29
      %s49 = sphi 0, %s49
      %s51 = sphi 0, %s49
      %s52 = sphi 0, %s51
      %s66 = sphi 0, %s52
      %s70 = sphi 0, %s70
      %s72 = sphi 0, %s70
      %s73 = sphi 0, %s72
      %s87 = sphi 0, %s73
      %s93 = sphi 0, %s95
      %s96 = sphi 0, %s93
      %s97 = sphi 0, %s96
      %s113 = sphi 0, %s97
      %s119 = sphi 0, %s121
      %s122 = sphi 0, %s119
      %s123 = sphi 0, %s122
      %s139 = sphi 0, %s123
      %s145 = sphi 0, %s147
      %s148 = sphi 0, %s145
      %s149 = sphi 0, %s148
      %s165 = sphi 0, %s149
    $region4: #{tpu_custom_call.1} parent=1 // loop_header_branch
      %18 = sbr.rel (%p16) target = $region8
    $region5: #{tpu_custom_call.1} parent=1 // loop_body
      %s20 = ssub.s32 %s15, 1
      %s21 = ssub.s32 %s15, 2
      %s22 = sadd.s32 %s15, 1
      %s23 = ssub.s32 %s15, %s22
      %p24 = scmp.eq.s32.totalorder %s23, 0
      %s26 = sadd.s32 %s25, 1
      %s27 = scalar_select %p24, %s25, %s26
      %p30 = pneg %p24
      %p31 = scmp.eq.s32.totalorder %s15, 1
      %p32 = por %p30, %p31
      %p33 = scmp.ne.s32.totalorder %s25, %s28
      %p34 = scmp.eq.s32.totalorder %s15, 0
      %p35 = por %p33, %p34
      %p36 = scmp.ne.s32.totalorder %s25, %s28
      %p37 = scmp.eq.s32.totalorder %s20, 1
      %p38 = por %p36, %p37
      %p39 = scmp.ne.s32.totalorder %s28, %s29
      %p40 = scmp.eq.s32.totalorder %s20, 0
      %p41 = por %p39, %p40
      %p42 = scmp.ne.s32.totalorder %s28, %s29
      %p43 = scmp.eq.s32.totalorder %s21, 1
      %p44 = por %p42, %p43
      %p46 = scmp.ne.s32.totalorder %s29, %s45
      %p47 = scmp.eq.s32.totalorder %s21, 0
      %p48 = por %p46, %p47
      %s50 = sadd.s32 %s49, 1
      %p53 = scmp.eq.s32.totalorder %s15, 1
      %p54 = scmp.ne.s32.totalorder %s49, %s51
      %p55 = scmp.eq.s32.totalorder %s15, 0
      %p56 = por %p54, %p55
      %p57 = scmp.ne.s32.totalorder %s49, %s51
      %p58 = scmp.eq.s32.totalorder %s20, 1
      %p59 = por %p57, %p58
      %p60 = scmp.ne.s32.totalorder %s51, %s52
      %p61 = scmp.eq.s32.totalorder %s20, 0
      %p62 = por %p60, %p61
      %p63 = scmp.ne.s32.totalorder %s51, %s52
      %p64 = scmp.eq.s32.totalorder %s21, 1
      %p65 = por %p63, %p64
      %p67 = scmp.ne.s32.totalorder %s52, %s66
      %p68 = scmp.eq.s32.totalorder %s21, 0
      %p69 = por %p67, %p68
      %s71 = sadd.s32 %s70, 1
      %p74 = scmp.eq.s32.totalorder %s15, 1
      %p75 = scmp.ne.s32.totalorder %s70, %s72
      %p76 = scmp.eq.s32.totalorder %s15, 0
      %p77 = por %p75, %p76
      %p78 = scmp.ne.s32.totalorder %s70, %s72
      %p79 = scmp.eq.s32.totalorder %s20, 1
      %p80 = por %p78, %p79
      %p81 = scmp.ne.s32.totalorder %s72, %s73
      %p82 = scmp.eq.s32.totalorder %s20, 0
      %p83 = por %p81, %p82
      %p84 = scmp.ne.s32.totalorder %s72, %s73
      %p85 = scmp.eq.s32.totalorder %s21, 1
      %p86 = por %p84, %p85
      %p88 = scmp.ne.s32.totalorder %s73, %s87
      %p89 = scmp.eq.s32.totalorder %s21, 0
      %p90 = por %p88, %p89
      %s91 = ssub.s32 %s15, %s22
      %p92 = scmp.eq.s32.totalorder %s91, 0
      %s94 = sadd.s32 %s93, 1
      %s95 = scalar_select %p92, %s93, %s94
      %p98 = pneg %p92
      %p99 = scmp.eq.s32.totalorder %s15, 1
      %p100 = por %p98, %p99
      %p101 = scmp.ne.s32.totalorder %s93, %s96
      %p102 = scmp.eq.s32.totalorder %s15, 0
      %p103 = por %p101, %p102
      %p104 = scmp.ne.s32.totalorder %s93, %s96
      %p105 = scmp.eq.s32.totalorder %s20, 1
      %p106 = por %p104, %p105
      %p107 = scmp.ne.s32.totalorder %s96, %s97
      %p108 = scmp.eq.s32.totalorder %s20, 0
      %p109 = por %p107, %p108
      %p110 = scmp.ne.s32.totalorder %s96, %s97
      %p111 = scmp.eq.s32.totalorder %s21, 1
      %p112 = por %p110, %p111
      %p114 = scmp.ne.s32.totalorder %s97, %s113
      %p115 = scmp.eq.s32.totalorder %s21, 0
      %p116 = por %p114, %p115
      %s117 = ssub.s32 %s15, %s22
      %p118 = scmp.eq.s32.totalorder %s117, 0
      %s120 = sadd.s32 %s119, 1
      %s121 = scalar_select %p118, %s119, %s120
      %p124 = pneg %p118
      %p125 = scmp.eq.s32.totalorder %s15, 1
      %p126 = por %p124, %p125
      %p127 = scmp.ne.s32.totalorder %s119, %s122
      %p128 = scmp.eq.s32.totalorder %s15, 0
      %p129 = por %p127, %p128
      %p130 = scmp.ne.s32.totalorder %s119, %s122
      %p131 = scmp.eq.s32.totalorder %s20, 1
      %p132 = por %p130, %p131
      %p133 = scmp.ne.s32.totalorder %s122, %s123
      %p134 = scmp.eq.s32.totalorder %s20, 0
      %p135 = por %p133, %p134
      %p136 = scmp.ne.s32.totalorder %s122, %s123
      %p137 = scmp.eq.s32.totalorder %s21, 1
      %p138 = por %p136, %p137
      %p140 = scmp.ne.s32.totalorder %s123, %s139
      %p141 = scmp.eq.s32.totalorder %s21, 0
      %p142 = por %p140, %p141
      %s143 = ssub.s32 %s15, %s22
      %p144 = scmp.eq.s32.totalorder %s143, 0
      %s146 = sadd.s32 %s145, 1
      %s147 = scalar_select %p144, %s145, %s146
      %p150 = pneg %p144
      %p151 = scmp.eq.s32.totalorder %s15, 1
      %p152 = por %p150, %p151
      %p153 = scmp.ne.s32.totalorder %s145, %s148
      %p154 = scmp.eq.s32.totalorder %s15, 0
      %p155 = por %p153, %p154
      %p156 = scmp.ne.s32.totalorder %s145, %s148
      %p157 = scmp.eq.s32.totalorder %s20, 1
      %p158 = por %p156, %p157
      %p159 = scmp.ne.s32.totalorder %s148, %s149
      %p160 = scmp.eq.s32.totalorder %s20, 0
      %p161 = por %p159, %p160
      %p162 = scmp.ne.s32.totalorder %s148, %s149
      %p163 = scmp.eq.s32.totalorder %s21, 1
      %p164 = por %p162, %p163
      %p166 = scmp.ne.s32.totalorder %s149, %s165
      %p167 = scmp.eq.s32.totalorder %s21, 0
      %p168 = por %p166, %p167
      %p169 = scmp.le.s32.totalorder 1, %s15
      %p170 = scmp.lt.s32.totalorder %s15, 3
      %p171 = pnand %p169, %p170
      %p172 = pneg %p171
      // Predicated region
      $region9: #{tpu_custom_call.1} parent=5 // pred_check
        _
      $region10: #{tpu_custom_call.1} parent=5 // pred_check_branch
        %174 = sbr.rel (%p171) target = $region12
      $region11: #{tpu_custom_call.1} parent=5 // pred_region
        %s175 = ssub.s32 %s15, 1
        // Predicated region
        $region13: #{tpu_custom_call.1} parent=11 // pred_check
          %p176 = pneg %p62
        $region14: #{tpu_custom_call.1} parent=11 // pred_check_branch
          %178 = sbr.rel (%p176) target = $region16
        $region15: #{tpu_custom_call.1} parent=11 // pred_region
          _
        $region16: #{tpu_custom_call.1} parent=11 // pred_fallthru
          _
        // Predicated region
        $region17: #{tpu_custom_call.1} parent=11 // pred_check
          %p179 = pneg %p83
        $region18: #{tpu_custom_call.1} parent=11 // pred_check_branch
          %181 = sbr.rel (%p179) target = $region20
        $region19: #{tpu_custom_call.1} parent=11 // pred_region
          _
        $region20: #{tpu_custom_call.1} parent=11 // pred_fallthru
          _
      $region12: #{tpu_custom_call.1} parent=5 // pred_fallthru
        _
      %p182 = scmp.lt.s32.totalorder %s15, 2
      // Predicated region
      $region21: #{tpu_custom_call.1} parent=5 // pred_check
        %p183 = pneg %p182
      $region22: #{tpu_custom_call.1} parent=5 // pred_check_branch
        %185 = sbr.rel (%p183) target = $region24
      $region23: #{tpu_custom_call.1} parent=5 // pred_region
        // Predicated region
        $region25: #{tpu_custom_call.1} parent=23 // pred_check
          %p186 = pneg %p35
        $region26: #{tpu_custom_call.1} parent=23 // pred_check_branch
          %188 = sbr.rel (%p186) target = $region28
        $region27: #{tpu_custom_call.1} parent=23 // pred_region
          %s189 = sand.u32 %s25, 1
          %s190 = scalar_lea.sflag [#allocation3], %s189
          %s191 = sand.u32 %s25, 1
          %s192 = smul.addr %s191, 768
          %s193 = scalar_lea.vmem [#allocation2], %s192
          %s194 = smul.u32 32, %s15
          %196 = vsyncadd %s190, 0
          %s197 = smul.addr %s194, 3
          %s198 = smul.addr %s197, 8
          %s199 = scalar_lea.hbm %s0, %s198
          %s200 = sshll.u32 %s199, 4
          %s201 = int_to_ptr.hbm [resolvable:$true] %s200
          %s202 = sshll.u32 %s193, 4
          %s203 = int_to_ptr.vmem [resolvable:$true] %s202
          %208 = dma.hbm_to_vmem [thread:$0]  %s201, 12288, %s203, %s190, 384, 384, 24
        $region28: #{tpu_custom_call.1} parent=23 // pred_fallthru
          _
        // Predicated region
        $region29: #{tpu_custom_call.1} parent=23 // pred_check
          %p209 = pneg %p103
        $region30: #{tpu_custom_call.1} parent=23 // pred_check_branch
          %211 = sbr.rel (%p209) target = $region32
        $region31: #{tpu_custom_call.1} parent=23 // pred_region
          %s212 = smul.u32 32, %s15
          %p213 = scmp.lt.s32.totalorder %s212, 63
          %s214 = scalar_select %p213, %s212, 63
          %s215 = smul.addr %s214, 8
          %s216 = scalar_lea.vmem %s3, %s215
          %s217 = smul.u32 32, %s15
        $region32: #{tpu_custom_call.1} parent=23 // pred_fallthru
          _
      $region24: #{tpu_custom_call.1} parent=5 // pred_fallthru
        _
      %p218 = scmp.le.s32.totalorder 1, %s15
      %p219 = scmp.lt.s32.totalorder %s15, 3
      %p220 = pnand %p218, %p219
      %p221 = pneg %p220
      // Predicated region
      $region33: #{tpu_custom_call.1} parent=5 // pred_check
        _
      $region34: #{tpu_custom_call.1} parent=5 // pred_check_branch
        %223 = sbr.rel (%p220) target = $region36
      $region35: #{tpu_custom_call.1} parent=5 // pred_region
        %s224 = ssub.s32 %s15, 1
        %s225 = sand.u32 %s28, 1
        %s226 = scalar_lea.sflag [#allocation3], %s225
        %s227 = sand.u32 %s28, 1
        %s228 = smul.addr %s227, 768
        %s229 = scalar_lea.vmem [#allocation2], %s228
        // Predicated region
        $region37: #{tpu_custom_call.1} parent=35 // pred_check
          %p230 = pneg %p41
        $region38: #{tpu_custom_call.1} parent=35 // pred_check_branch
          %232 = sbr.rel (%p230) target = $region40
        $region39: #{tpu_custom_call.1} parent=35 // pred_region
          %234 = dma.done %s226, 12288
        $region40: #{tpu_custom_call.1} parent=35 // pred_fallthru
          _
        %s235 = sand.u32 %s28, 1
        %s236 = scalar_lea.sflag [#allocation3], %s235
        %s237 = sand.u32 %s28, 1
        %s238 = smul.addr %s237, 768
        %s239 = scalar_lea.vmem [#allocation2], %s238
        %p240 = pneg %p41
        %p241 = pneg %p38
        %p242 = pneg %p62
        %p243 = pneg %p59
        %p244 = pneg %p83
        %p245 = pneg %p80
        %s246 = smul.u32 32, %s20
        %p247 = scmp.lt.s32.totalorder %s246, 63
        %s248 = scalar_select %p247, %s246, 63
        %s249 = smul.addr %s248, 8
        %s250 = scalar_lea.vmem %s3, %s249
        %p251 = pneg %p109
        %p252 = pneg %p106
        %p253 = pneg %p135
        %p254 = pneg %p132
        %s255 = smul.u32 32, %s20
        %p256 = scmp.lt.s32.totalorder %s255, 63
        %s257 = scalar_select %p256, %s255, 63
        %s258 = smul.addr %s257, 8
        %s259 = scalar_lea.vmem %s4, %s258
        %p260 = pneg %p161
        %p261 = pneg %p158
        %s262 = smul.u32 32, %s20
        %p263 = scmp.lt.s32.totalorder %s262, 63
        %s264 = scalar_select %p263, %s262, 63
        %s265 = smul.addr %s264, 8
        %s266 = scalar_lea.vmem %s5, %s265
        %s267 = smul.u32 32, %s20
        %s268 = smul.u32 32, %s20
        %p269 = scmp.lt.s32.totalorder %s268, 63
        %s270 = scalar_select %p269, %s268, 63
        %s271 = smul.addr %s270, 8
        %s272 = scalar_lea.vmem %s3, %s271
        %s273 = smul.u32 32, %s20
        %s274 = smul.u32 32, %s20
        %p275 = scmp.lt.s32.totalorder %s274, 63
        %s276 = scalar_select %p275, %s274, 63
        %s277 = smul.addr %s276, 8
        %s278 = scalar_lea.vmem %s4, %s277
        %s279 = smul.u32 32, %s20
        %s280 = smul.u32 32, %s20
        %p281 = scmp.lt.s32.totalorder %s280, 63
        %s282 = scalar_select %p281, %s280, 63
        %s283 = smul.addr %s282, 8
        %s284 = scalar_lea.vmem %s5, %s283
        %s285 = smul.u32 32, %s20
        %v286 = vld [vmem:[%s229] sm:$0xff]
        %v287 = vld [vmem:[%s229 + $0x8] sm:$0xff]
        %v288 = vld [vmem:[%s229 + $0x10] sm:$0xff]
        %v289 = vld [vmem:[%s229 + $0x18] sm:$0xff]
        %v290 = vld [vmem:[%s229 + $0x20] sm:$0xff]
        %v291 = vld [vmem:[%s229 + $0x28] sm:$0xff]
        %v292 = vld [vmem:[%s229 + $0x30] sm:$0xff]
        %v293 = vld [vmem:[%s229 + $0x38] sm:$0xff]
        %v294 = vld [vmem:[%s229 + $0x40] sm:$0xff]
        %v295 = vld [vmem:[%s229 + $0x48] sm:$0xff]
        %v296 = vld [vmem:[%s229 + $0x50] sm:$0xff]
        %v297 = vld [vmem:[%s229 + $0x58] sm:$0xff]
        %v298 = vld [vmem:[%s229 + $0x60] sm:$0xff]
        %v299 = vld [vmem:[%s229 + $0x68] sm:$0xff]
        %v300 = vld [vmem:[%s229 + $0x70] sm:$0xff]
        %v301 = vld [vmem:[%s229 + $0x78] sm:$0xff]
        %v302 = vld [vmem:[%s229 + $0x80] sm:$0xff]
        %v303 = vld [vmem:[%s229 + $0x88] sm:$0xff]
        %v304 = vld [vmem:[%s229 + $0x90] sm:$0xff]
        %v305 = vld [vmem:[%s229 + $0x98] sm:$0xff]
        %v306 = vld [vmem:[%s229 + $0xa0] sm:$0xff]
        %v307 = vld [vmem:[%s229 + $0xa8] sm:$0xff]
        %v308 = vld [vmem:[%s229 + $0xb0] sm:$0xff]
        %v309 = vld [vmem:[%s229 + $0xb8] sm:$0xff]
        %v310 = vld [vmem:[%s229 + $0xc0] sm:$0xff]
        %v311 = vld [vmem:[%s229 + $0xc8] sm:$0xff]
        %v312 = vld [vmem:[%s229 + $0xd0] sm:$0xff]
        %v313 = vld [vmem:[%s229 + $0xd8] sm:$0xff]
        %v314 = vld [vmem:[%s229 + $0xe0] sm:$0xff]
        %v315 = vld [vmem:[%s229 + $0xe8] sm:$0xff]
        %v316 = vld [vmem:[%s229 + $0xf0] sm:$0xff]
        %v317 = vld [vmem:[%s229 + $0xf8] sm:$0xff]
        %v318 = vld [vmem:[%s229 + $0x100] sm:$0xff]
        %v319 = vld [vmem:[%s229 + $0x108] sm:$0xff]
        %v320 = vld [vmem:[%s229 + $0x110] sm:$0xff]
        %v321 = vld [vmem:[%s229 + $0x118] sm:$0xff]
        %v322 = vld [vmem:[%s229 + $0x120] sm:$0xff]
        %v323 = vld [vmem:[%s229 + $0x128] sm:$0xff]
        %v324 = vld [vmem:[%s229 + $0x130] sm:$0xff]
        %v325 = vld [vmem:[%s229 + $0x138] sm:$0xff]
        %v326 = vld [vmem:[%s229 + $0x140] sm:$0xff]
        %v327 = vld [vmem:[%s229 + $0x148] sm:$0xff]
        %v328 = vld [vmem:[%s229 + $0x150] sm:$0xff]
        %v329 = vld [vmem:[%s229 + $0x158] sm:$0xff]
        %v330 = vld [vmem:[%s229 + $0x160] sm:$0xff]
        %v331 = vld [vmem:[%s229 + $0x168] sm:$0xff]
        %v332 = vld [vmem:[%s229 + $0x170] sm:$0xff]
        %v333 = vld [vmem:[%s229 + $0x178] sm:$0xff]
        %v334 = vld [vmem:[%s229 + $0x180] sm:$0xff]
        %v335 = vld [vmem:[%s229 + $0x188] sm:$0xff]
        %v336 = vld [vmem:[%s229 + $0x190] sm:$0xff]
        %v337 = vld [vmem:[%s229 + $0x198] sm:$0xff]
        %v338 = vld [vmem:[%s229 + $0x1a0] sm:$0xff]
        %v339 = vld [vmem:[%s229 + $0x1a8] sm:$0xff]
        %v340 = vld [vmem:[%s229 + $0x1b0] sm:$0xff]
        %v341 = vld [vmem:[%s229 + $0x1b8] sm:$0xff]
        %v342 = vld [vmem:[%s229 + $0x1c0] sm:$0xff]
        %v343 = vld [vmem:[%s229 + $0x1c8] sm:$0xff]
        %v344 = vld [vmem:[%s229 + $0x1d0] sm:$0xff]
        %v345 = vld [vmem:[%s229 + $0x1d8] sm:$0xff]
        %v346 = vld [vmem:[%s229 + $0x1e0] sm:$0xff]
        %v347 = vld [vmem:[%s229 + $0x1e8] sm:$0xff]
        %v348 = vld [vmem:[%s229 + $0x1f0] sm:$0xff]
        %v349 = vld [vmem:[%s229 + $0x1f8] sm:$0xff]
        %v350 = vld [vmem:[%s229 + $0x200] sm:$0xff]
        %v351 = vld [vmem:[%s229 + $0x208] sm:$0xff]
        %v352 = vld [vmem:[%s229 + $0x210] sm:$0xff]
        %v353 = vld [vmem:[%s229 + $0x218] sm:$0xff]
        %v354 = vld [vmem:[%s229 + $0x220] sm:$0xff]
        %v355 = vld [vmem:[%s229 + $0x228] sm:$0xff]
        %v356 = vld [vmem:[%s229 + $0x230] sm:$0xff]
        %v357 = vld [vmem:[%s229 + $0x238] sm:$0xff]
        %v358 = vld [vmem:[%s229 + $0x240] sm:$0xff]
        %v359 = vld [vmem:[%s229 + $0x248] sm:$0xff]
        %v360 = vld [vmem:[%s229 + $0x250] sm:$0xff]
        %v361 = vld [vmem:[%s229 + $0x258] sm:$0xff]
        %v362 = vld [vmem:[%s229 + $0x260] sm:$0xff]
        %v363 = vld [vmem:[%s229 + $0x268] sm:$0xff]
        %v364 = vld [vmem:[%s229 + $0x270] sm:$0xff]
        %v365 = vld [vmem:[%s229 + $0x278] sm:$0xff]
        %v366 = vld [vmem:[%s229 + $0x280] sm:$0xff]
        %v367 = vld [vmem:[%s229 + $0x288] sm:$0xff]
        %v368 = vld [vmem:[%s229 + $0x290] sm:$0xff]
        %v369 = vld [vmem:[%s229 + $0x298] sm:$0xff]
        %v370 = vld [vmem:[%s229 + $0x2a0] sm:$0xff]
        %v371 = vld [vmem:[%s229 + $0x2a8] sm:$0xff]
        %v372 = vld [vmem:[%s229 + $0x2b0] sm:$0xff]
        %v373 = vld [vmem:[%s229 + $0x2b8] sm:$0xff]
        %v374 = vld [vmem:[%s229 + $0x2c0] sm:$0xff]
        %v375 = vld [vmem:[%s229 + $0x2c8] sm:$0xff]
        %v376 = vld [vmem:[%s229 + $0x2d0] sm:$0xff]
        %v377 = vld [vmem:[%s229 + $0x2d8] sm:$0xff]
        %v378 = vld [vmem:[%s229 + $0x2e0] sm:$0xff]
        %v379 = vld [vmem:[%s229 + $0x2e8] sm:$0xff]
        %v380 = vld [vmem:[%s229 + $0x2f0] sm:$0xff]
        %v381 = vld [vmem:[%s229 + $0x2f8] sm:$0xff]
        %v382 = vld [vmem:[%s1] sm:$0xff]
        %v383 = vld [vmem:[%s1 + $0x8] sm:$0xff]
        %v384 = vld [vmem:[%s1 + $0x10] sm:$0xff]
        %v385 = vld [vmem:[%s1 + $0x18] sm:$0xff]
        %v386 = vld [vmem:[%s1 + $0x20] sm:$0xff]
        %v387 = vld [vmem:[%s1 + $0x28] sm:$0xff]
        %v388 = vld [vmem:[%s1 + $0x30] sm:$0xff]
        %v389 = vld [vmem:[%s1 + $0x38] sm:$0xff]
        %v390 = vld [vmem:[%s1 + $0x40] sm:$0xff]
        %v391 = vld [vmem:[%s1 + $0x48] sm:$0xff]
        %v392 = vld [vmem:[%s1 + $0x50] sm:$0xff]
        %v393 = vld [vmem:[%s1 + $0x58] sm:$0xff]
        %v394 = vld [vmem:[%s1 + $0x60] sm:$0xff]
        %v395 = vld [vmem:[%s1 + $0x68] sm:$0xff]
        %v396 = vld [vmem:[%s1 + $0x70] sm:$0xff]
        %v397 = vld [vmem:[%s1 + $0x78] sm:$0xff]
        %v398 = vld [vmem:[%s1 + $0x80] sm:$0xff]
        %v399 = vld [vmem:[%s1 + $0x88] sm:$0xff]
        %v400 = vld [vmem:[%s1 + $0x90] sm:$0xff]
        %v401 = vld [vmem:[%s1 + $0x98] sm:$0xff]
        %v402 = vld [vmem:[%s1 + $0xa0] sm:$0xff]
        %v403 = vld [vmem:[%s1 + $0xa8] sm:$0xff]
        %v404 = vld [vmem:[%s1 + $0xb0] sm:$0xff]
        %v405 = vld [vmem:[%s1 + $0xb8] sm:$0xff]
        %v406 = vld [vmem:[%s1 + $0xc0] sm:$0xff]
        %v407 = vld [vmem:[%s1 + $0xc8] sm:$0xff]
        %v408 = vld [vmem:[%s1 + $0xd0] sm:$0xff]
        %v409 = vld [vmem:[%s1 + $0xd8] sm:$0xff]
        %v410 = vld [vmem:[%s1 + $0xe0] sm:$0xff]
        %v411 = vld [vmem:[%s1 + $0xe8] sm:$0xff]
        %v412 = vld [vmem:[%s1 + $0xf0] sm:$0xff]
        %v413 = vld [vmem:[%s1 + $0xf8] sm:$0xff]
        %v414 = vld [vmem:[%s1 + $0x100] sm:$0xff]
        %v415 = vld [vmem:[%s1 + $0x108] sm:$0xff]
        %v416 = vld [vmem:[%s1 + $0x110] sm:$0xff]
        %v417 = vld [vmem:[%s1 + $0x118] sm:$0xff]
        %v418 = vld [vmem:[%s1 + $0x120] sm:$0xff]
        %v419 = vld [vmem:[%s1 + $0x128] sm:$0xff]
        %v420 = vld [vmem:[%s1 + $0x130] sm:$0xff]
        %v421 = vld [vmem:[%s1 + $0x138] sm:$0xff]
        %v422 = vld [vmem:[%s1 + $0x140] sm:$0xff]
        %v423 = vld [vmem:[%s1 + $0x148] sm:$0xff]
        %v424 = vld [vmem:[%s1 + $0x150] sm:$0xff]
        %v425 = vld [vmem:[%s1 + $0x158] sm:$0xff]
        %v426 = vld [vmem:[%s1 + $0x160] sm:$0xff]
        %v427 = vld [vmem:[%s1 + $0x168] sm:$0xff]
        %v428 = vld [vmem:[%s1 + $0x170] sm:$0xff]
        %v429 = vld [vmem:[%s1 + $0x178] sm:$0xff]
        %v430 = vld [vmem:[%s2] sm:$0x1]
        %v432 = vperm.slane %v430, 0
        %434 = vmatpush.msra.mxu0 %v397
        %435 = vmatpush.msra.mxu0 %v396
        %436 = vmatpush.msra.mxu0 %v395
        %437 = vmatpush.msra.mxu0 %v394
        %438 = vmatpush.msra.mxu0 %v393
        %439 = vmatpush.msra.mxu0 %v392
        %440 = vmatpush.msra.mxu0 %v391
        %441 = vmatpush.msra.mxu0 %v390
        %442 = vmatpush.msra.mxu0 %v389
        %443 = vmatpush.msra.mxu0 %v388
        %444 = vmatpush.msra.mxu0 %v387
        %445 = vmatpush.msra.mxu0 %v386
        %446 = vmatpush.msra.mxu0 %v385
        %447 = vmatpush.msra.mxu0 %v384
        %448 = vmatpush.msra.mxu0 %v383
        %449 = vmatpush.msra.mxu0 %v382
        %450 = vmatmul.f32.gmra.mxu0 %v286
        %v451 = vpop.f32.mrf.mxu0
        %v452 = vadd.f32 %v432, %v451
        %453 = vmatmul.f32.gmra.mxu0 %v289
        %v454 = vpop.f32.mrf.mxu0
        %v455 = vadd.f32 %v432, %v454
        %456 = vmatmul.f32.gmra.mxu0 %v292
        %v457 = vpop.f32.mrf.mxu0
        %v458 = vadd.f32 %v432, %v457
        %459 = vmatmul.f32.gmra.mxu0 %v295
        %v460 = vpop.f32.mrf.mxu0
        %v461 = vadd.f32 %v432, %v460
        %462 = vmatmul.f32.gmra.mxu0 %v298
        %v463 = vpop.f32.mrf.mxu0
        %v464 = vadd.f32 %v432, %v463
        %465 = vmatmul.f32.gmra.mxu0 %v301
        %v466 = vpop.f32.mrf.mxu0
        %v467 = vadd.f32 %v432, %v466
        %468 = vmatmul.f32.gmra.mxu0 %v304
        %v469 = vpop.f32.mrf.mxu0
        %v470 = vadd.f32 %v432, %v469
        %471 = vmatmul.f32.gmra.mxu0 %v307
        %v472 = vpop.f32.mrf.mxu0
        %v473 = vadd.f32 %v432, %v472
        %474 = vmatmul.f32.gmra.mxu0 %v310
        %v475 = vpop.f32.mrf.mxu0
        %v476 = vadd.f32 %v432, %v475
        %477 = vmatmul.f32.gmra.mxu0 %v313
        %v478 = vpop.f32.mrf.mxu0
        %v479 = vadd.f32 %v432, %v478
        %480 = vmatmul.f32.gmra.mxu0 %v316
        %v481 = vpop.f32.mrf.mxu0
        %v482 = vadd.f32 %v432, %v481
        %483 = vmatmul.f32.gmra.mxu0 %v319
        %v484 = vpop.f32.mrf.mxu0
        %v485 = vadd.f32 %v432, %v484
        %486 = vmatmul.f32.gmra.mxu0 %v322
        %v487 = vpop.f32.mrf.mxu0
        %v488 = vadd.f32 %v432, %v487
        %489 = vmatmul.f32.gmra.mxu0 %v325
        %v490 = vpop.f32.mrf.mxu0
        %v491 = vadd.f32 %v432, %v490
        %492 = vmatmul.f32.gmra.mxu0 %v328
        %v493 = vpop.f32.mrf.mxu0
        %v494 = vadd.f32 %v432, %v493
        %495 = vmatmul.f32.gmra.mxu0 %v331
        %v496 = vpop.f32.mrf.mxu0
        %v497 = vadd.f32 %v432, %v496
        %498 = vmatmul.f32.gmra.mxu0 %v334
        %v499 = vpop.f32.mrf.mxu0
        %v500 = vadd.f32 %v432, %v499
        %501 = vmatmul.f32.gmra.mxu0 %v337
        %v502 = vpop.f32.mrf.mxu0
        %v503 = vadd.f32 %v432, %v502
        %504 = vmatmul.f32.gmra.mxu0 %v340
        %v505 = vpop.f32.mrf.mxu0
        %v506 = vadd.f32 %v432, %v505
        %507 = vmatmul.f32.gmra.mxu0 %v343
        %v508 = vpop.f32.mrf.mxu0
        %v509 = vadd.f32 %v432, %v508
        %510 = vmatmul.f32.gmra.mxu0 %v346
        %v511 = vpop.f32.mrf.mxu0
        %v512 = vadd.f32 %v432, %v511
        %513 = vmatmul.f32.gmra.mxu0 %v349
        %v514 = vpop.f32.mrf.mxu0
        %v515 = vadd.f32 %v432, %v514
        %516 = vmatmul.f32.gmra.mxu0 %v352
        %v517 = vpop.f32.mrf.mxu0
        %v518 = vadd.f32 %v432, %v517
        %519 = vmatmul.f32.gmra.mxu0 %v355
        %v520 = vpop.f32.mrf.mxu0
        %v521 = vadd.f32 %v432, %v520
        %522 = vmatmul.f32.gmra.mxu0 %v358
        %v523 = vpop.f32.mrf.mxu0
        %v524 = vadd.f32 %v432, %v523
        %525 = vmatmul.f32.gmra.mxu0 %v361
        %v526 = vpop.f32.mrf.mxu0
        %v527 = vadd.f32 %v432, %v526
        %528 = vmatmul.f32.gmra.mxu0 %v364
        %v529 = vpop.f32.mrf.mxu0
        %v530 = vadd.f32 %v432, %v529
        %531 = vmatmul.f32.gmra.mxu0 %v367
        %v532 = vpop.f32.mrf.mxu0
        %v533 = vadd.f32 %v432, %v532
        %534 = vmatmul.f32.gmra.mxu0 %v370
        %v535 = vpop.f32.mrf.mxu0
        %v536 = vadd.f32 %v432, %v535
        %537 = vmatmul.f32.gmra.mxu0 %v373
        %v538 = vpop.f32.mrf.mxu0
        %v539 = vadd.f32 %v432, %v538
        %540 = vmatmul.f32.gmra.mxu0 %v376
        %v541 = vpop.f32.mrf.mxu0
        %v542 = vadd.f32 %v432, %v541
        %543 = vmatmul.f32.gmra.mxu0 %v379
        %v544 = vpop.f32.mrf.mxu0
        %v545 = vadd.f32 %v432, %v544
        %546 = vdwg.mxu0
        %547 = vmatpush.msra.mxu0 %v413
        %548 = vmatpush.msra.mxu0 %v412
        %549 = vmatpush.msra.mxu0 %v411
        %550 = vmatpush.msra.mxu0 %v410
        %551 = vmatpush.msra.mxu0 %v409
        %552 = vmatpush.msra.mxu0 %v408
        %553 = vmatpush.msra.mxu0 %v407
        %554 = vmatpush.msra.mxu0 %v406
        %555 = vmatpush.msra.mxu0 %v405
        %556 = vmatpush.msra.mxu0 %v404
        %557 = vmatpush.msra.mxu0 %v403
        %558 = vmatpush.msra.mxu0 %v402
        %559 = vmatpush.msra.mxu0 %v401
        %560 = vmatpush.msra.mxu0 %v400
        %561 = vmatpush.msra.mxu0 %v399
        %562 = vmatpush.msra.mxu0 %v398
        %563 = vmatmul.f32.gmra.mxu0 %v287
        %v564 = vpop.f32.mrf.mxu0
        %v565 = vadd.f32 %v452, %v564
        %566 = vmatmul.f32.gmra.mxu0 %v290
        %v567 = vpop.f32.mrf.mxu0
        %v568 = vadd.f32 %v455, %v567
        %569 = vmatmul.f32.gmra.mxu0 %v293
        %v570 = vpop.f32.mrf.mxu0
        %v571 = vadd.f32 %v458, %v570
        %572 = vmatmul.f32.gmra.mxu0 %v296
        %v573 = vpop.f32.mrf.mxu0
        %v574 = vadd.f32 %v461, %v573
        %575 = vmatmul.f32.gmra.mxu0 %v299
        %v576 = vpop.f32.mrf.mxu0
        %v577 = vadd.f32 %v464, %v576
        %578 = vmatmul.f32.gmra.mxu0 %v302
        %v579 = vpop.f32.mrf.mxu0
        %v580 = vadd.f32 %v467, %v579
        %581 = vmatmul.f32.gmra.mxu0 %v305
        %v582 = vpop.f32.mrf.mxu0
        %v583 = vadd.f32 %v470, %v582
        %584 = vmatmul.f32.gmra.mxu0 %v308
        %v585 = vpop.f32.mrf.mxu0
        %v586 = vadd.f32 %v473, %v585
        %587 = vmatmul.f32.gmra.mxu0 %v311
        %v588 = vpop.f32.mrf.mxu0
        %v589 = vadd.f32 %v476, %v588
        %590 = vmatmul.f32.gmra.mxu0 %v314
        %v591 = vpop.f32.mrf.mxu0
        %v592 = vadd.f32 %v479, %v591
        %593 = vmatmul.f32.gmra.mxu0 %v317
        %v594 = vpop.f32.mrf.mxu0
        %v595 = vadd.f32 %v482, %v594
        %596 = vmatmul.f32.gmra.mxu0 %v320
        %v597 = vpop.f32.mrf.mxu0
        %v598 = vadd.f32 %v485, %v597
        %599 = vmatmul.f32.gmra.mxu0 %v323
        %v600 = vpop.f32.mrf.mxu0
        %v601 = vadd.f32 %v488, %v600
        %602 = vmatmul.f32.gmra.mxu0 %v326
        %v603 = vpop.f32.mrf.mxu0
        %v604 = vadd.f32 %v491, %v603
        %605 = vmatmul.f32.gmra.mxu0 %v329
        %v606 = vpop.f32.mrf.mxu0
        %v607 = vadd.f32 %v494, %v606
        %608 = vmatmul.f32.gmra.mxu0 %v332
        %v609 = vpop.f32.mrf.mxu0
        %v610 = vadd.f32 %v497, %v609
        %611 = vmatmul.f32.gmra.mxu0 %v335
        %v612 = vpop.f32.mrf.mxu0
        %v613 = vadd.f32 %v500, %v612
        %614 = vmatmul.f32.gmra.mxu0 %v338
        %v615 = vpop.f32.mrf.mxu0
        %v616 = vadd.f32 %v503, %v615
        %617 = vmatmul.f32.gmra.mxu0 %v341
        %v618 = vpop.f32.mrf.mxu0
        %v619 = vadd.f32 %v506, %v618
        %620 = vmatmul.f32.gmra.mxu0 %v344
        %v621 = vpop.f32.mrf.mxu0
        %v622 = vadd.f32 %v509, %v621
        %623 = vmatmul.f32.gmra.mxu0 %v347
        %v624 = vpop.f32.mrf.mxu0
        %v625 = vadd.f32 %v512, %v624
        %626 = vmatmul.f32.gmra.mxu0 %v350
        %v627 = vpop.f32.mrf.mxu0
        %v628 = vadd.f32 %v515, %v627
        %629 = vmatmul.f32.gmra.mxu0 %v353
        %v630 = vpop.f32.mrf.mxu0
        %v631 = vadd.f32 %v518, %v630
        %632 = vmatmul.f32.gmra.mxu0 %v356
        %v633 = vpop.f32.mrf.mxu0
        %v634 = vadd.f32 %v521, %v633
        %635 = vmatmul.f32.gmra.mxu0 %v359
        %v636 = vpop.f32.mrf.mxu0
        %v637 = vadd.f32 %v524, %v636
        %638 = vmatmul.f32.gmra.mxu0 %v362
        %v639 = vpop.f32.mrf.mxu0
        %v640 = vadd.f32 %v527, %v639
        %641 = vmatmul.f32.gmra.mxu0 %v365
        %v642 = vpop.f32.mrf.mxu0
        %v643 = vadd.f32 %v530, %v642
        %644 = vmatmul.f32.gmra.mxu0 %v368
        %v645 = vpop.f32.mrf.mxu0
        %v646 = vadd.f32 %v533, %v645
        %647 = vmatmul.f32.gmra.mxu0 %v371
        %v648 = vpop.f32.mrf.mxu0
        %v649 = vadd.f32 %v536, %v648
        %650 = vmatmul.f32.gmra.mxu0 %v374
        %v651 = vpop.f32.mrf.mxu0
        %v652 = vadd.f32 %v539, %v651
        %653 = vmatmul.f32.gmra.mxu0 %v377
        %v654 = vpop.f32.mrf.mxu0
        %v655 = vadd.f32 %v542, %v654
        %656 = vmatmul.f32.gmra.mxu0 %v380
        %v657 = vpop.f32.mrf.mxu0
        %v658 = vadd.f32 %v545, %v657
        %659 = vdwg.mxu0
        %660 = vmatpush.msra.mxu0 %v429
        %661 = vmatpush.msra.mxu0 %v428
        %662 = vmatpush.msra.mxu0 %v427
        %663 = vmatpush.msra.mxu0 %v426
        %664 = vmatpush.msra.mxu0 %v425
        %665 = vmatpush.msra.mxu0 %v424
        %666 = vmatpush.msra.mxu0 %v423
        %667 = vmatpush.msra.mxu0 %v422
        %668 = vmatpush.msra.mxu0 %v421
        %669 = vmatpush.msra.mxu0 %v420
        %670 = vmatpush.msra.mxu0 %v419
        %671 = vmatpush.msra.mxu0 %v418
        %672 = vmatpush.msra.mxu0 %v417
        %673 = vmatpush.msra.mxu0 %v416
        %674 = vmatpush.msra.mxu0 %v415
        %675 = vmatpush.msra.mxu0 %v414
        %676 = vmatmul.f32.gmra.mxu0 %v288
        %v677 = vpop.f32.mrf.mxu0
        %v678 = vadd.f32 %v565, %v677
        %679 = vmatmul.f32.gmra.mxu0 %v291
        %v680 = vpop.f32.mrf.mxu0
        %v681 = vadd.f32 %v568, %v680
        %682 = vmatmul.f32.gmra.mxu0 %v294
        %v683 = vpop.f32.mrf.mxu0
        %v684 = vadd.f32 %v571, %v683
        %685 = vmatmul.f32.gmra.mxu0 %v297
        %v686 = vpop.f32.mrf.mxu0
        %v687 = vadd.f32 %v574, %v686
        %688 = vmatmul.f32.gmra.mxu0 %v300
        %v689 = vpop.f32.mrf.mxu0
        %v690 = vadd.f32 %v577, %v689
        %691 = vmatmul.f32.gmra.mxu0 %v303
        %v692 = vpop.f32.mrf.mxu0
        %v693 = vadd.f32 %v580, %v692
        %694 = vmatmul.f32.gmra.mxu0 %v306
        %v695 = vpop.f32.mrf.mxu0
        %v696 = vadd.f32 %v583, %v695
        %697 = vmatmul.f32.gmra.mxu0 %v309
        %v698 = vpop.f32.mrf.mxu0
        %v699 = vadd.f32 %v586, %v698
        %700 = vmatmul.f32.gmra.mxu0 %v312
        %v701 = vpop.f32.mrf.mxu0
        %v702 = vadd.f32 %v589, %v701
        %703 = vmatmul.f32.gmra.mxu0 %v315
        %v704 = vpop.f32.mrf.mxu0
        %v705 = vadd.f32 %v592, %v704
        %706 = vmatmul.f32.gmra.mxu0 %v318
        %v707 = vpop.f32.mrf.mxu0
        %v708 = vadd.f32 %v595, %v707
        %709 = vmatmul.f32.gmra.mxu0 %v321
        %v710 = vpop.f32.mrf.mxu0
        %v711 = vadd.f32 %v598, %v710
        %712 = vmatmul.f32.gmra.mxu0 %v324
        %v713 = vpop.f32.mrf.mxu0
        %v714 = vadd.f32 %v601, %v713
        %715 = vmatmul.f32.gmra.mxu0 %v327
        %v716 = vpop.f32.mrf.mxu0
        %v717 = vadd.f32 %v604, %v716
        %718 = vmatmul.f32.gmra.mxu0 %v330
        %v719 = vpop.f32.mrf.mxu0
        %v720 = vadd.f32 %v607, %v719
        %721 = vmatmul.f32.gmra.mxu0 %v333
        %v722 = vpop.f32.mrf.mxu0
        %v723 = vadd.f32 %v610, %v722
        %724 = vmatmul.f32.gmra.mxu0 %v336
        %v725 = vpop.f32.mrf.mxu0
        %v726 = vadd.f32 %v613, %v725
        %727 = vmatmul.f32.gmra.mxu0 %v339
        %v728 = vpop.f32.mrf.mxu0
        %v729 = vadd.f32 %v616, %v728
        %730 = vmatmul.f32.gmra.mxu0 %v342
        %v731 = vpop.f32.mrf.mxu0
        %v732 = vadd.f32 %v619, %v731
        %733 = vmatmul.f32.gmra.mxu0 %v345
        %v734 = vpop.f32.mrf.mxu0
        %v735 = vadd.f32 %v622, %v734
        %736 = vmatmul.f32.gmra.mxu0 %v348
        %v737 = vpop.f32.mrf.mxu0
        %v738 = vadd.f32 %v625, %v737
        %739 = vmatmul.f32.gmra.mxu0 %v351
        %v740 = vpop.f32.mrf.mxu0
        %v741 = vadd.f32 %v628, %v740
        %742 = vmatmul.f32.gmra.mxu0 %v354
        %v743 = vpop.f32.mrf.mxu0
        %v744 = vadd.f32 %v631, %v743
        %745 = vmatmul.f32.gmra.mxu0 %v357
        %v746 = vpop.f32.mrf.mxu0
        %v747 = vadd.f32 %v634, %v746
        %748 = vmatmul.f32.gmra.mxu0 %v360
        %v749 = vpop.f32.mrf.mxu0
        %v750 = vadd.f32 %v637, %v749
        %751 = vmatmul.f32.gmra.mxu0 %v363
        %v752 = vpop.f32.mrf.mxu0
        %v753 = vadd.f32 %v640, %v752
        %754 = vmatmul.f32.gmra.mxu0 %v366
        %v755 = vpop.f32.mrf.mxu0
        %v756 = vadd.f32 %v643, %v755
        %757 = vmatmul.f32.gmra.mxu0 %v369
        %v758 = vpop.f32.mrf.mxu0
        %v759 = vadd.f32 %v646, %v758
        %760 = vmatmul.f32.gmra.mxu0 %v372
        %v761 = vpop.f32.mrf.mxu0
        %v762 = vadd.f32 %v649, %v761
        %763 = vmatmul.f32.gmra.mxu0 %v375
        %v764 = vpop.f32.mrf.mxu0
        %v765 = vadd.f32 %v652, %v764
        %766 = vmatmul.f32.gmra.mxu0 %v378
        %v767 = vpop.f32.mrf.mxu0
        %v768 = vadd.f32 %v655, %v767
        %769 = vmatmul.f32.gmra.mxu0 %v381
        %v770 = vpop.f32.mrf.mxu0
        %v771 = vadd.f32 %v658, %v770
        %772 = vdwg.mxu0
        %v773 = vmul.f32 %v678, 0.5
        %v774 = vmul.f32 %v681, 0.5
        %v775 = vmul.f32 %v684, 0.5
        %v776 = vmul.f32 %v687, 0.5
        %v777 = vmul.f32 %v690, 0.5
        %v778 = vmul.f32 %v693, 0.5
        %v779 = vmul.f32 %v696, 0.5
        %v780 = vmul.f32 %v699, 0.5
        %v781 = vmul.f32 %v702, 0.5
        %v782 = vmul.f32 %v705, 0.5
        %v783 = vmul.f32 %v708, 0.5
        %v784 = vmul.f32 %v711, 0.5
        %v785 = vmul.f32 %v714, 0.5
        %v786 = vmul.f32 %v717, 0.5
        %v787 = vmul.f32 %v720, 0.5
        %v788 = vmul.f32 %v723, 0.5
        %v789 = vmul.f32 %v726, 0.5
        %v790 = vmul.f32 %v729, 0.5
        %v791 = vmul.f32 %v732, 0.5
        %v792 = vmul.f32 %v735, 0.5
        %v793 = vmul.f32 %v738, 0.5
        %v794 = vmul.f32 %v741, 0.5
        %v795 = vmul.f32 %v744, 0.5
        %v796 = vmul.f32 %v747, 0.5
        %v797 = vmul.f32 %v750, 0.5
        %v798 = vmul.f32 %v753, 0.5
        %v799 = vmul.f32 %v756, 0.5
        %v800 = vmul.f32 %v759, 0.5
        %v801 = vmul.f32 %v762, 0.5
        %v802 = vmul.f32 %v765, 0.5
        %v803 = vmul.f32 %v768, 0.5
        %v804 = vmul.f32 %v771, 0.5
        %v805 = vtanh.pop %v773
        %v806 = vtanh.pop %v774
        %v807 = vtanh.pop %v775
        %v808 = vtanh.pop %v776
        %v809 = vtanh.pop %v777
        %v810 = vtanh.pop %v778
        %v811 = vtanh.pop %v779
        %v812 = vtanh.pop %v780
        %v813 = vtanh.pop %v781
        %v814 = vtanh.pop %v782
        %v815 = vtanh.pop %v783
        %v816 = vtanh.pop %v784
        %v817 = vtanh.pop %v785
        %v818 = vtanh.pop %v786
        %v819 = vtanh.pop %v787
        %v820 = vtanh.pop %v788
        %v821 = vtanh.pop %v789
        %v822 = vtanh.pop %v790
        %v823 = vtanh.pop %v791
        %v824 = vtanh.pop %v792
        %v825 = vtanh.pop %v793
        %v826 = vtanh.pop %v794
        %v827 = vtanh.pop %v795
        %v828 = vtanh.pop %v796
        %v829 = vtanh.pop %v797
        %v830 = vtanh.pop %v798
        %v831 = vtanh.pop %v799
        %v832 = vtanh.pop %v800
        %v833 = vtanh.pop %v801
        %v834 = vtanh.pop %v802
        %v835 = vtanh.pop %v803
        %v836 = vtanh.pop %v804
        %v837 = vadd.f32 %v805, 1.0
        %v838 = vadd.f32 %v806, 1.0
        %v839 = vadd.f32 %v807, 1.0
        %v840 = vadd.f32 %v808, 1.0
        %v841 = vadd.f32 %v809, 1.0
        %v842 = vadd.f32 %v810, 1.0
        %v843 = vadd.f32 %v811, 1.0
        %v844 = vadd.f32 %v812, 1.0
        %v845 = vadd.f32 %v813, 1.0
        %v846 = vadd.f32 %v814, 1.0
        %v847 = vadd.f32 %v815, 1.0
        %v848 = vadd.f32 %v816, 1.0
        %v849 = vadd.f32 %v817, 1.0
        %v850 = vadd.f32 %v818, 1.0
        %v851 = vadd.f32 %v819, 1.0
        %v852 = vadd.f32 %v820, 1.0
        %v853 = vadd.f32 %v821, 1.0
        %v854 = vadd.f32 %v822, 1.0
        %v855 = vadd.f32 %v823, 1.0
        %v856 = vadd.f32 %v824, 1.0
        %v857 = vadd.f32 %v825, 1.0
        %v858 = vadd.f32 %v826, 1.0
        %v859 = vadd.f32 %v827, 1.0
        %v860 = vadd.f32 %v828, 1.0
        %v861 = vadd.f32 %v829, 1.0
        %v862 = vadd.f32 %v830, 1.0
        %v863 = vadd.f32 %v831, 1.0
        %v864 = vadd.f32 %v832, 1.0
        %v865 = vadd.f32 %v833, 1.0
        %v866 = vadd.f32 %v834, 1.0
        %v867 = vadd.f32 %v835, 1.0
        %v868 = vadd.f32 %v836, 1.0
        %v869 = vmul.f32 %v837, 0.5
        %v870 = vmul.f32 %v838, 0.5
        %v871 = vmul.f32 %v839, 0.5
        %v872 = vmul.f32 %v840, 0.5
        %v873 = vmul.f32 %v841, 0.5
        %v874 = vmul.f32 %v842, 0.5
        %v875 = vmul.f32 %v843, 0.5
        %v876 = vmul.f32 %v844, 0.5
        %v877 = vmul.f32 %v845, 0.5
        %v878 = vmul.f32 %v846, 0.5
        %v879 = vmul.f32 %v847, 0.5
        %v880 = vmul.f32 %v848, 0.5
        %v881 = vmul.f32 %v849, 0.5
        %v882 = vmul.f32 %v850, 0.5
        %v883 = vmul.f32 %v851, 0.5
        %v884 = vmul.f32 %v852, 0.5
        %v885 = vmul.f32 %v853, 0.5
        %v886 = vmul.f32 %v854, 0.5
        %v887 = vmul.f32 %v855, 0.5
        %v888 = vmul.f32 %v856, 0.5
        %v889 = vmul.f32 %v857, 0.5
        %v890 = vmul.f32 %v858, 0.5
        %v891 = vmul.f32 %v859, 0.5
        %v892 = vmul.f32 %v860, 0.5
        %v893 = vmul.f32 %v861, 0.5
        %v894 = vmul.f32 %v862, 0.5
        %v895 = vmul.f32 %v863, 0.5
        %v896 = vmul.f32 %v864, 0.5
        %v897 = vmul.f32 %v865, 0.5
        %v898 = vmul.f32 %v866, 0.5
        %v899 = vmul.f32 %v867, 0.5
        %v900 = vmul.f32 %v868, 0.5
        %v901 = vtanh.pop %v678
        %v902 = vtanh.pop %v681
        %v903 = vtanh.pop %v684
        %v904 = vtanh.pop %v687
        %v905 = vtanh.pop %v690
        %v906 = vtanh.pop %v693
        %v907 = vtanh.pop %v696
        %v908 = vtanh.pop %v699
        %v909 = vtanh.pop %v702
        %v910 = vtanh.pop %v705
        %v911 = vtanh.pop %v708
        %v912 = vtanh.pop %v711
        %v913 = vtanh.pop %v714
        %v914 = vtanh.pop %v717
        %v915 = vtanh.pop %v720
        %v916 = vtanh.pop %v723
        %v917 = vtanh.pop %v726
        %v918 = vtanh.pop %v729
        %v919 = vtanh.pop %v732
        %v920 = vtanh.pop %v735
        %v921 = vtanh.pop %v738
        %v922 = vtanh.pop %v741
        %v923 = vtanh.pop %v744
        %v924 = vtanh.pop %v747
        %v925 = vtanh.pop %v750
        %v926 = vtanh.pop %v753
        %v927 = vtanh.pop %v756
        %v928 = vtanh.pop %v759
        %v929 = vtanh.pop %v762
        %v930 = vtanh.pop %v765
        %v931 = vtanh.pop %v768
        %v932 = vtanh.pop %v771
        %v933 = vld [vmem:[%s272] sm:$0xff]
        %v934 = vld [vmem:[%s272 + $0x8] sm:$0xff]
        %v935 = vld [vmem:[%s272 + $0x10] sm:$0xff]
        %v936 = vld [vmem:[%s272 + $0x18] sm:$0xff]
        %v937 = vld [vmem:[%s272 + $0x20] sm:$0xff]
        %v938 = vld [vmem:[%s272 + $0x28] sm:$0xff]
        %v939 = vld [vmem:[%s272 + $0x30] sm:$0xff]
        %v940 = vld [vmem:[%s272 + $0x38] sm:$0xff]
        %v941 = vld [vmem:[%s272 + $0x40] sm:$0xff]
        %v942 = vld [vmem:[%s272 + $0x48] sm:$0xff]
        %v943 = vld [vmem:[%s272 + $0x50] sm:$0xff]
        %v944 = vld [vmem:[%s272 + $0x58] sm:$0xff]
        %v945 = vld [vmem:[%s272 + $0x60] sm:$0xff]
        %v946 = vld [vmem:[%s272 + $0x68] sm:$0xff]
        %v947 = vld [vmem:[%s272 + $0x70] sm:$0xff]
        %v948 = vld [vmem:[%s272 + $0x78] sm:$0xff]
        %v949 = vld [vmem:[%s272 + $0x80] sm:$0xff]
        %v950 = vld [vmem:[%s272 + $0x88] sm:$0xff]
        %v951 = vld [vmem:[%s272 + $0x90] sm:$0xff]
        %v952 = vld [vmem:[%s272 + $0x98] sm:$0xff]
        %v953 = vld [vmem:[%s272 + $0xa0] sm:$0xff]
        %v954 = vld [vmem:[%s272 + $0xa8] sm:$0xff]
        %v955 = vld [vmem:[%s272 + $0xb0] sm:$0xff]
        %v956 = vld [vmem:[%s272 + $0xb8] sm:$0xff]
        %v957 = vld [vmem:[%s272 + $0xc0] sm:$0xff]
        %v958 = vld [vmem:[%s272 + $0xc8] sm:$0xff]
        %v959 = vld [vmem:[%s272 + $0xd0] sm:$0xff]
        %v960 = vld [vmem:[%s272 + $0xd8] sm:$0xff]
        %v961 = vld [vmem:[%s272 + $0xe0] sm:$0xff]
        %v962 = vld [vmem:[%s272 + $0xe8] sm:$0xff]
        %v963 = vld [vmem:[%s272 + $0xf0] sm:$0xff]
        %v964 = vld [vmem:[%s272 + $0xf8] sm:$0xff]
        %997 = vrot.lane.b32.xlu0 %v933, 32
        %v998 = vpop.permute.xlu0 %997
        %999 = vrot.lane.b32.xlu0 %v934, 32
        %v1000 = vpop.permute.xlu0 %999
        %1001 = vrot.lane.b32.xlu0 %v935, 32
        %v1002 = vpop.permute.xlu0 %1001
        %1003 = vrot.lane.b32.xlu0 %v936, 32
        %v1004 = vpop.permute.xlu0 %1003
        %1005 = vrot.lane.b32.xlu0 %v937, 32
        %v1006 = vpop.permute.xlu0 %1005
        %1007 = vrot.lane.b32.xlu0 %v938, 32
        %v1008 = vpop.permute.xlu0 %1007
        %1009 = vrot.lane.b32.xlu0 %v939, 32
        %v1010 = vpop.permute.xlu0 %1009
        %1011 = vrot.lane.b32.xlu0 %v940, 32
        %v1012 = vpop.permute.xlu0 %1011
        %1013 = vrot.lane.b32.xlu0 %v941, 32
        %v1014 = vpop.permute.xlu0 %1013
        %1015 = vrot.lane.b32.xlu0 %v942, 32
        %v1016 = vpop.permute.xlu0 %1015
        %1017 = vrot.lane.b32.xlu0 %v943, 32
        %v1018 = vpop.permute.xlu0 %1017
        %1019 = vrot.lane.b32.xlu0 %v944, 32
        %v1020 = vpop.permute.xlu0 %1019
        %1021 = vrot.lane.b32.xlu0 %v945, 32
        %v1022 = vpop.permute.xlu0 %1021
        %1023 = vrot.lane.b32.xlu0 %v946, 32
        %v1024 = vpop.permute.xlu0 %1023
        %1025 = vrot.lane.b32.xlu0 %v947, 32
        %v1026 = vpop.permute.xlu0 %1025
        %1027 = vrot.lane.b32.xlu0 %v948, 32
        %v1028 = vpop.permute.xlu0 %1027
        %1029 = vrot.lane.b32.xlu0 %v949, 32
        %v1030 = vpop.permute.xlu0 %1029
        %1031 = vrot.lane.b32.xlu0 %v950, 32
        %v1032 = vpop.permute.xlu0 %1031
        %1033 = vrot.lane.b32.xlu0 %v951, 32
        %v1034 = vpop.permute.xlu0 %1033
        %1035 = vrot.lane.b32.xlu0 %v952, 32
        %v1036 = vpop.permute.xlu0 %1035
        %1037 = vrot.lane.b32.xlu0 %v953, 32
        %v1038 = vpop.permute.xlu0 %1037
        %1039 = vrot.lane.b32.xlu0 %v954, 32
        %v1040 = vpop.permute.xlu0 %1039
        %1041 = vrot.lane.b32.xlu0 %v955, 32
        %v1042 = vpop.permute.xlu0 %1041
        %1043 = vrot.lane.b32.xlu0 %v956, 32
        %v1044 = vpop.permute.xlu0 %1043
        %1045 = vrot.lane.b32.xlu0 %v957, 32
        %v1046 = vpop.permute.xlu0 %1045
        %1047 = vrot.lane.b32.xlu0 %v958, 32
        %v1048 = vpop.permute.xlu0 %1047
        %1049 = vrot.lane.b32.xlu0 %v959, 32
        %v1050 = vpop.permute.xlu0 %1049
        %1051 = vrot.lane.b32.xlu0 %v960, 32
        %v1052 = vpop.permute.xlu0 %1051
        %1053 = vrot.lane.b32.xlu0 %v961, 32
        %v1054 = vpop.permute.xlu0 %1053
        %1055 = vrot.lane.b32.xlu0 %v962, 32
        %v1056 = vpop.permute.xlu0 %1055
        %1057 = vrot.lane.b32.xlu0 %v963, 32
        %v1058 = vpop.permute.xlu0 %1057
        %1059 = vrot.lane.b32.xlu0 %v964, 32
        %v1060 = vpop.permute.xlu0 %1059
        %v1093 = vmul.f32 %v869, %v998
        %v1094 = vmul.f32 %v870, %v1000
        %v1095 = vmul.f32 %v871, %v1002
        %v1096 = vmul.f32 %v872, %v1004
        %v1097 = vmul.f32 %v873, %v1006
        %v1098 = vmul.f32 %v874, %v1008
        %v1099 = vmul.f32 %v875, %v1010
        %v1100 = vmul.f32 %v876, %v1012
        %v1101 = vmul.f32 %v877, %v1014
        %v1102 = vmul.f32 %v878, %v1016
        %v1103 = vmul.f32 %v879, %v1018
        %v1104 = vmul.f32 %v880, %v1020
        %v1105 = vmul.f32 %v881, %v1022
        %v1106 = vmul.f32 %v882, %v1024
        %v1107 = vmul.f32 %v883, %v1026
        %v1108 = vmul.f32 %v884, %v1028
        %v1109 = vmul.f32 %v885, %v1030
        %v1110 = vmul.f32 %v886, %v1032
        %v1111 = vmul.f32 %v887, %v1034
        %v1112 = vmul.f32 %v888, %v1036
        %v1113 = vmul.f32 %v889, %v1038
        %v1114 = vmul.f32 %v890, %v1040
        %v1115 = vmul.f32 %v891, %v1042
        %v1116 = vmul.f32 %v892, %v1044
        %v1117 = vmul.f32 %v893, %v1046
        %v1118 = vmul.f32 %v894, %v1048
        %v1119 = vmul.f32 %v895, %v1050
        %v1120 = vmul.f32 %v896, %v1052
        %v1121 = vmul.f32 %v897, %v1054
        %v1122 = vmul.f32 %v898, %v1056
        %v1123 = vmul.f32 %v899, %v1058
        %v1124 = vmul.f32 %v900, %v1060
        %1157 = vrot.lane.b32.xlu0 %v901, 32
        %v1158 = vpop.permute.xlu0 %1157
        %1159 = vrot.lane.b32.xlu0 %v902, 32
        %v1160 = vpop.permute.xlu0 %1159
        %1161 = vrot.lane.b32.xlu0 %v903, 32
        %v1162 = vpop.permute.xlu0 %1161
        %1163 = vrot.lane.b32.xlu0 %v904, 32
        %v1164 = vpop.permute.xlu0 %1163
        %1165 = vrot.lane.b32.xlu0 %v905, 32
        %v1166 = vpop.permute.xlu0 %1165
        %1167 = vrot.lane.b32.xlu0 %v906, 32
        %v1168 = vpop.permute.xlu0 %1167
        %1169 = vrot.lane.b32.xlu0 %v907, 32
        %v1170 = vpop.permute.xlu0 %1169
        %1171 = vrot.lane.b32.xlu0 %v908, 32
        %v1172 = vpop.permute.xlu0 %1171
        %1173 = vrot.lane.b32.xlu0 %v909, 32
        %v1174 = vpop.permute.xlu0 %1173
        %1175 = vrot.lane.b32.xlu0 %v910, 32
        %v1176 = vpop.permute.xlu0 %1175
        %1177 = vrot.lane.b32.xlu0 %v911, 32
        %v1178 = vpop.permute.xlu0 %1177
        %1179 = vrot.lane.b32.xlu0 %v912, 32
        %v1180 = vpop.permute.xlu0 %1179
        %1181 = vrot.lane.b32.xlu0 %v913, 32
        %v1182 = vpop.permute.xlu0 %1181
        %1183 = vrot.lane.b32.xlu0 %v914, 32
        %v1184 = vpop.permute.xlu0 %1183
        %1185 = vrot.lane.b32.xlu0 %v915, 32
        %v1186 = vpop.permute.xlu0 %1185
        %1187 = vrot.lane.b32.xlu0 %v916, 32
        %v1188 = vpop.permute.xlu0 %1187
        %1189 = vrot.lane.b32.xlu0 %v917, 32
        %v1190 = vpop.permute.xlu0 %1189
        %1191 = vrot.lane.b32.xlu0 %v918, 32
        %v1192 = vpop.permute.xlu0 %1191
        %1193 = vrot.lane.b32.xlu0 %v919, 32
        %v1194 = vpop.permute.xlu0 %1193
        %1195 = vrot.lane.b32.xlu0 %v920, 32
        %v1196 = vpop.permute.xlu0 %1195
        %1197 = vrot.lane.b32.xlu0 %v921, 32
        %v1198 = vpop.permute.xlu0 %1197
        %1199 = vrot.lane.b32.xlu0 %v922, 32
        %v1200 = vpop.permute.xlu0 %1199
        %1201 = vrot.lane.b32.xlu0 %v923, 32
        %v1202 = vpop.permute.xlu0 %1201
        %1203 = vrot.lane.b32.xlu0 %v924, 32
        %v1204 = vpop.permute.xlu0 %1203
        %1205 = vrot.lane.b32.xlu0 %v925, 32
        %v1206 = vpop.permute.xlu0 %1205
        %1207 = vrot.lane.b32.xlu0 %v926, 32
        %v1208 = vpop.permute.xlu0 %1207
        %1209 = vrot.lane.b32.xlu0 %v927, 32
        %v1210 = vpop.permute.xlu0 %1209
        %1211 = vrot.lane.b32.xlu0 %v928, 32
        %v1212 = vpop.permute.xlu0 %1211
        %1213 = vrot.lane.b32.xlu0 %v929, 32
        %v1214 = vpop.permute.xlu0 %1213
        %1215 = vrot.lane.b32.xlu0 %v930, 32
        %v1216 = vpop.permute.xlu0 %1215
        %1217 = vrot.lane.b32.xlu0 %v931, 32
        %v1218 = vpop.permute.xlu0 %1217
        %1219 = vrot.lane.b32.xlu0 %v932, 32
        %v1220 = vpop.permute.xlu0 %1219
        %v1253 = vmul.f32 %v869, %v1158
        %v1254 = vmul.f32 %v870, %v1160
        %v1255 = vmul.f32 %v871, %v1162
        %v1256 = vmul.f32 %v872, %v1164
        %v1257 = vmul.f32 %v873, %v1166
        %v1258 = vmul.f32 %v874, %v1168
        %v1259 = vmul.f32 %v875, %v1170
        %v1260 = vmul.f32 %v876, %v1172
        %v1261 = vmul.f32 %v877, %v1174
        %v1262 = vmul.f32 %v878, %v1176
        %v1263 = vmul.f32 %v879, %v1178
        %v1264 = vmul.f32 %v880, %v1180
        %v1265 = vmul.f32 %v881, %v1182
        %v1266 = vmul.f32 %v882, %v1184
        %v1267 = vmul.f32 %v883, %v1186
        %v1268 = vmul.f32 %v884, %v1188
        %v1269 = vmul.f32 %v885, %v1190
        %v1270 = vmul.f32 %v886, %v1192
        %v1271 = vmul.f32 %v887, %v1194
        %v1272 = vmul.f32 %v888, %v1196
        %v1273 = vmul.f32 %v889, %v1198
        %v1274 = vmul.f32 %v890, %v1200
        %v1275 = vmul.f32 %v891, %v1202
        %v1276 = vmul.f32 %v892, %v1204
        %v1277 = vmul.f32 %v893, %v1206
        %v1278 = vmul.f32 %v894, %v1208
        %v1279 = vmul.f32 %v895, %v1210
        %v1280 = vmul.f32 %v896, %v1212
        %v1281 = vmul.f32 %v897, %v1214
        %v1282 = vmul.f32 %v898, %v1216
        %v1283 = vmul.f32 %v899, %v1218
        %v1284 = vmul.f32 %v900, %v1220
        %1317 = vrot.lane.b32.xlu0 %v1253, 32
        %v1318 = vpop.permute.xlu0 %1317
        %1319 = vrot.lane.b32.xlu0 %v1254, 32
        %v1320 = vpop.permute.xlu0 %1319
        %1321 = vrot.lane.b32.xlu0 %v1255, 32
        %v1322 = vpop.permute.xlu0 %1321
        %1323 = vrot.lane.b32.xlu0 %v1256, 32
        %v1324 = vpop.permute.xlu0 %1323
        %1325 = vrot.lane.b32.xlu0 %v1257, 32
        %v1326 = vpop.permute.xlu0 %1325
        %1327 = vrot.lane.b32.xlu0 %v1258, 32
        %v1328 = vpop.permute.xlu0 %1327
        %1329 = vrot.lane.b32.xlu0 %v1259, 32
        %v1330 = vpop.permute.xlu0 %1329
        %1331 = vrot.lane.b32.xlu0 %v1260, 32
        %v1332 = vpop.permute.xlu0 %1331
        %1333 = vrot.lane.b32.xlu0 %v1261, 32
        %v1334 = vpop.permute.xlu0 %1333
        %1335 = vrot.lane.b32.xlu0 %v1262, 32
        %v1336 = vpop.permute.xlu0 %1335
        %1337 = vrot.lane.b32.xlu0 %v1263, 32
        %v1338 = vpop.permute.xlu0 %1337
        %1339 = vrot.lane.b32.xlu0 %v1264, 32
        %v1340 = vpop.permute.xlu0 %1339
        %1341 = vrot.lane.b32.xlu0 %v1265, 32
        %v1342 = vpop.permute.xlu0 %1341
        %1343 = vrot.lane.b32.xlu0 %v1266, 32
        %v1344 = vpop.permute.xlu0 %1343
        %1345 = vrot.lane.b32.xlu0 %v1267, 32
        %v1346 = vpop.permute.xlu0 %1345
        %1347 = vrot.lane.b32.xlu0 %v1268, 32
        %v1348 = vpop.permute.xlu0 %1347
        %1349 = vrot.lane.b32.xlu0 %v1269, 32
        %v1350 = vpop.permute.xlu0 %1349
        %1351 = vrot.lane.b32.xlu0 %v1270, 32
        %v1352 = vpop.permute.xlu0 %1351
        %1353 = vrot.lane.b32.xlu0 %v1271, 32
        %v1354 = vpop.permute.xlu0 %1353
        %1355 = vrot.lane.b32.xlu0 %v1272, 32
        %v1356 = vpop.permute.xlu0 %1355
        %1357 = vrot.lane.b32.xlu0 %v1273, 32
        %v1358 = vpop.permute.xlu0 %1357
        %1359 = vrot.lane.b32.xlu0 %v1274, 32
        %v1360 = vpop.permute.xlu0 %1359
        %1361 = vrot.lane.b32.xlu0 %v1275, 32
        %v1362 = vpop.permute.xlu0 %1361
        %1363 = vrot.lane.b32.xlu0 %v1276, 32
        %v1364 = vpop.permute.xlu0 %1363
        %1365 = vrot.lane.b32.xlu0 %v1277, 32
        %v1366 = vpop.permute.xlu0 %1365
        %1367 = vrot.lane.b32.xlu0 %v1278, 32
        %v1368 = vpop.permute.xlu0 %1367
        %1369 = vrot.lane.b32.xlu0 %v1279, 32
        %v1370 = vpop.permute.xlu0 %1369
        %1371 = vrot.lane.b32.xlu0 %v1280, 32
        %v1372 = vpop.permute.xlu0 %1371
        %1373 = vrot.lane.b32.xlu0 %v1281, 32
        %v1374 = vpop.permute.xlu0 %1373
        %1375 = vrot.lane.b32.xlu0 %v1282, 32
        %v1376 = vpop.permute.xlu0 %1375
        %1377 = vrot.lane.b32.xlu0 %v1283, 32
        %v1378 = vpop.permute.xlu0 %1377
        %1379 = vrot.lane.b32.xlu0 %v1284, 32
        %v1380 = vpop.permute.xlu0 %1379
        %v1413 = vadd.f32 %v1093, %v1318
        %v1414 = vadd.f32 %v1094, %v1320
        %v1415 = vadd.f32 %v1095, %v1322
        %v1416 = vadd.f32 %v1096, %v1324
        %v1417 = vadd.f32 %v1097, %v1326
        %v1418 = vadd.f32 %v1098, %v1328
        %v1419 = vadd.f32 %v1099, %v1330
        %v1420 = vadd.f32 %v1100, %v1332
        %v1421 = vadd.f32 %v1101, %v1334
        %v1422 = vadd.f32 %v1102, %v1336
        %v1423 = vadd.f32 %v1103, %v1338
        %v1424 = vadd.f32 %v1104, %v1340
        %v1425 = vadd.f32 %v1105, %v1342
        %v1426 = vadd.f32 %v1106, %v1344
        %v1427 = vadd.f32 %v1107, %v1346
        %v1428 = vadd.f32 %v1108, %v1348
        %v1429 = vadd.f32 %v1109, %v1350
        %v1430 = vadd.f32 %v1110, %v1352
        %v1431 = vadd.f32 %v1111, %v1354
        %v1432 = vadd.f32 %v1112, %v1356
        %v1433 = vadd.f32 %v1113, %v1358
        %v1434 = vadd.f32 %v1114, %v1360
        %v1435 = vadd.f32 %v1115, %v1362
        %v1436 = vadd.f32 %v1116, %v1364
        %v1437 = vadd.f32 %v1117, %v1366
        %v1438 = vadd.f32 %v1118, %v1368
        %v1439 = vadd.f32 %v1119, %v1370
        %v1440 = vadd.f32 %v1120, %v1372
        %v1441 = vadd.f32 %v1121, %v1374
        %v1442 = vadd.f32 %v1122, %v1376
        %v1443 = vadd.f32 %v1123, %v1378
        %v1444 = vadd.f32 %v1124, %v1380
        %v1445 = vtanh.pop %v1413
        %v1446 = vtanh.pop %v1414
        %v1447 = vtanh.pop %v1415
        %v1448 = vtanh.pop %v1416
        %v1449 = vtanh.pop %v1417
        %v1450 = vtanh.pop %v1418
        %v1451 = vtanh.pop %v1419
        %v1452 = vtanh.pop %v1420
        %v1453 = vtanh.pop %v1421
        %v1454 = vtanh.pop %v1422
        %v1455 = vtanh.pop %v1423
        %v1456 = vtanh.pop %v1424
        %v1457 = vtanh.pop %v1425
        %v1458 = vtanh.pop %v1426
        %v1459 = vtanh.pop %v1427
        %v1460 = vtanh.pop %v1428
        %v1461 = vtanh.pop %v1429
        %v1462 = vtanh.pop %v1430
        %v1463 = vtanh.pop %v1431
        %v1464 = vtanh.pop %v1432
        %v1465 = vtanh.pop %v1433
        %v1466 = vtanh.pop %v1434
        %v1467 = vtanh.pop %v1435
        %v1468 = vtanh.pop %v1436
        %v1469 = vtanh.pop %v1437
        %v1470 = vtanh.pop %v1438
        %v1471 = vtanh.pop %v1439
        %v1472 = vtanh.pop %v1440
        %v1473 = vtanh.pop %v1441
        %v1474 = vtanh.pop %v1442
        %v1475 = vtanh.pop %v1443
        %v1476 = vtanh.pop %v1444
        %1509 = vrot.lane.b32.xlu0 %v1445, 32
        %v1510 = vpop.permute.xlu0 %1509
        %1511 = vrot.lane.b32.xlu0 %v1446, 32
        %v1512 = vpop.permute.xlu0 %1511
        %1513 = vrot.lane.b32.xlu0 %v1447, 32
        %v1514 = vpop.permute.xlu0 %1513
        %1515 = vrot.lane.b32.xlu0 %v1448, 32
        %v1516 = vpop.permute.xlu0 %1515
        %1517 = vrot.lane.b32.xlu0 %v1449, 32
        %v1518 = vpop.permute.xlu0 %1517
        %1519 = vrot.lane.b32.xlu0 %v1450, 32
        %v1520 = vpop.permute.xlu0 %1519
        %1521 = vrot.lane.b32.xlu0 %v1451, 32
        %v1522 = vpop.permute.xlu0 %1521
        %1523 = vrot.lane.b32.xlu0 %v1452, 32
        %v1524 = vpop.permute.xlu0 %1523
        %1525 = vrot.lane.b32.xlu0 %v1453, 32
        %v1526 = vpop.permute.xlu0 %1525
        %1527 = vrot.lane.b32.xlu0 %v1454, 32
        %v1528 = vpop.permute.xlu0 %1527
        %1529 = vrot.lane.b32.xlu0 %v1455, 32
        %v1530 = vpop.permute.xlu0 %1529
        %1531 = vrot.lane.b32.xlu0 %v1456, 32
        %v1532 = vpop.permute.xlu0 %1531
        %1533 = vrot.lane.b32.xlu0 %v1457, 32
        %v1534 = vpop.permute.xlu0 %1533
        %1535 = vrot.lane.b32.xlu0 %v1458, 32
        %v1536 = vpop.permute.xlu0 %1535
        %1537 = vrot.lane.b32.xlu0 %v1459, 32
        %v1538 = vpop.permute.xlu0 %1537
        %1539 = vrot.lane.b32.xlu0 %v1460, 32
        %v1540 = vpop.permute.xlu0 %1539
        %1541 = vrot.lane.b32.xlu0 %v1461, 32
        %v1542 = vpop.permute.xlu0 %1541
        %1543 = vrot.lane.b32.xlu0 %v1462, 32
        %v1544 = vpop.permute.xlu0 %1543
        %1545 = vrot.lane.b32.xlu0 %v1463, 32
        %v1546 = vpop.permute.xlu0 %1545
        %1547 = vrot.lane.b32.xlu0 %v1464, 32
        %v1548 = vpop.permute.xlu0 %1547
        %1549 = vrot.lane.b32.xlu0 %v1465, 32
        %v1550 = vpop.permute.xlu0 %1549
        %1551 = vrot.lane.b32.xlu0 %v1466, 32
        %v1552 = vpop.permute.xlu0 %1551
        %1553 = vrot.lane.b32.xlu0 %v1467, 32
        %v1554 = vpop.permute.xlu0 %1553
        %1555 = vrot.lane.b32.xlu0 %v1468, 32
        %v1556 = vpop.permute.xlu0 %1555
        %1557 = vrot.lane.b32.xlu0 %v1469, 32
        %v1558 = vpop.permute.xlu0 %1557
        %1559 = vrot.lane.b32.xlu0 %v1470, 32
        %v1560 = vpop.permute.xlu0 %1559
        %1561 = vrot.lane.b32.xlu0 %v1471, 32
        %v1562 = vpop.permute.xlu0 %1561
        %1563 = vrot.lane.b32.xlu0 %v1472, 32
        %v1564 = vpop.permute.xlu0 %1563
        %1565 = vrot.lane.b32.xlu0 %v1473, 32
        %v1566 = vpop.permute.xlu0 %1565
        %1567 = vrot.lane.b32.xlu0 %v1474, 32
        %v1568 = vpop.permute.xlu0 %1567
        %1569 = vrot.lane.b32.xlu0 %v1475, 32
        %v1570 = vpop.permute.xlu0 %1569
        %1571 = vrot.lane.b32.xlu0 %v1476, 32
        %v1572 = vpop.permute.xlu0 %1571
        %v1605 = vmul.f32 %v869, %v1510
        %v1606 = vmul.f32 %v870, %v1512
        %v1607 = vmul.f32 %v871, %v1514
        %v1608 = vmul.f32 %v872, %v1516
        %v1609 = vmul.f32 %v873, %v1518
        %v1610 = vmul.f32 %v874, %v1520
        %v1611 = vmul.f32 %v875, %v1522
        %v1612 = vmul.f32 %v876, %v1524
        %v1613 = vmul.f32 %v877, %v1526
        %v1614 = vmul.f32 %v878, %v1528
        %v1615 = vmul.f32 %v879, %v1530
        %v1616 = vmul.f32 %v880, %v1532
        %v1617 = vmul.f32 %v881, %v1534
        %v1618 = vmul.f32 %v882, %v1536
        %v1619 = vmul.f32 %v883, %v1538
        %v1620 = vmul.f32 %v884, %v1540
        %v1621 = vmul.f32 %v885, %v1542
        %v1622 = vmul.f32 %v886, %v1544
        %v1623 = vmul.f32 %v887, %v1546
        %v1624 = vmul.f32 %v888, %v1548
        %v1625 = vmul.f32 %v889, %v1550
        %v1626 = vmul.f32 %v890, %v1552
        %v1627 = vmul.f32 %v891, %v1554
        %v1628 = vmul.f32 %v892, %v1556
        %v1629 = vmul.f32 %v893, %v1558
        %v1630 = vmul.f32 %v894, %v1560
        %v1631 = vmul.f32 %v895, %v1562
        %v1632 = vmul.f32 %v896, %v1564
        %v1633 = vmul.f32 %v897, %v1566
        %v1634 = vmul.f32 %v898, %v1568
        %v1635 = vmul.f32 %v899, %v1570
        %v1636 = vmul.f32 %v900, %v1572
        %1669 = vrot.lane.b32.xlu0 %v1605, 64
        %v1670 = vpop.permute.xlu0 %1669
        %1671 = vrot.lane.b32.xlu0 %v1606, 64
        %v1672 = vpop.permute.xlu0 %1671
        %1673 = vrot.lane.b32.xlu0 %v1607, 64
        %v1674 = vpop.permute.xlu0 %1673
        %1675 = vrot.lane.b32.xlu0 %v1608, 64
        %v1676 = vpop.permute.xlu0 %1675
        %1677 = vrot.lane.b32.xlu0 %v1609, 64
        %v1678 = vpop.permute.xlu0 %1677
        %1679 = vrot.lane.b32.xlu0 %v1610, 64
        %v1680 = vpop.permute.xlu0 %1679
        %1681 = vrot.lane.b32.xlu0 %v1611, 64
        %v1682 = vpop.permute.xlu0 %1681
        %1683 = vrot.lane.b32.xlu0 %v1612, 64
        %v1684 = vpop.permute.xlu0 %1683
        %1685 = vrot.lane.b32.xlu0 %v1613, 64
        %v1686 = vpop.permute.xlu0 %1685
        %1687 = vrot.lane.b32.xlu0 %v1614, 64
        %v1688 = vpop.permute.xlu0 %1687
        %1689 = vrot.lane.b32.xlu0 %v1615, 64
        %v1690 = vpop.permute.xlu0 %1689
        %1691 = vrot.lane.b32.xlu0 %v1616, 64
        %v1692 = vpop.permute.xlu0 %1691
        %1693 = vrot.lane.b32.xlu0 %v1617, 64
        %v1694 = vpop.permute.xlu0 %1693
        %1695 = vrot.lane.b32.xlu0 %v1618, 64
        %v1696 = vpop.permute.xlu0 %1695
        %1697 = vrot.lane.b32.xlu0 %v1619, 64
        %v1698 = vpop.permute.xlu0 %1697
        %1699 = vrot.lane.b32.xlu0 %v1620, 64
        %v1700 = vpop.permute.xlu0 %1699
        %1701 = vrot.lane.b32.xlu0 %v1621, 64
        %v1702 = vpop.permute.xlu0 %1701
        %1703 = vrot.lane.b32.xlu0 %v1622, 64
        %v1704 = vpop.permute.xlu0 %1703
        %1705 = vrot.lane.b32.xlu0 %v1623, 64
        %v1706 = vpop.permute.xlu0 %1705
        %1707 = vrot.lane.b32.xlu0 %v1624, 64
        %v1708 = vpop.permute.xlu0 %1707
        %1709 = vrot.lane.b32.xlu0 %v1625, 64
        %v1710 = vpop.permute.xlu0 %1709
        %1711 = vrot.lane.b32.xlu0 %v1626, 64
        %v1712 = vpop.permute.xlu0 %1711
        %1713 = vrot.lane.b32.xlu0 %v1627, 64
        %v1714 = vpop.permute.xlu0 %1713
        %1715 = vrot.lane.b32.xlu0 %v1628, 64
        %v1716 = vpop.permute.xlu0 %1715
        %1717 = vrot.lane.b32.xlu0 %v1629, 64
        %v1718 = vpop.permute.xlu0 %1717
        %1719 = vrot.lane.b32.xlu0 %v1630, 64
        %v1720 = vpop.permute.xlu0 %1719
        %1721 = vrot.lane.b32.xlu0 %v1631, 64
        %v1722 = vpop.permute.xlu0 %1721
        %1723 = vrot.lane.b32.xlu0 %v1632, 64
        %v1724 = vpop.permute.xlu0 %1723
        %1725 = vrot.lane.b32.xlu0 %v1633, 64
        %v1726 = vpop.permute.xlu0 %1725
        %1727 = vrot.lane.b32.xlu0 %v1634, 64
        %v1728 = vpop.permute.xlu0 %1727
        %1729 = vrot.lane.b32.xlu0 %v1635, 64
        %v1730 = vpop.permute.xlu0 %1729
        %1731 = vrot.lane.b32.xlu0 %v1636, 64
        %v1732 = vpop.permute.xlu0 %1731
        %vm1765 = vcmask 261120
        %1766 = vst.msk [vmem:[%s278] sm:$0xff] %vm1765, %v1670
        %1767 = vst.msk [vmem:[%s278 + $0x8] sm:$0xff] %vm1765, %v1672
        %1768 = vst.msk [vmem:[%s278 + $0x10] sm:$0xff] %vm1765, %v1674
        %1769 = vst.msk [vmem:[%s278 + $0x18] sm:$0xff] %vm1765, %v1676
        %1770 = vst.msk [vmem:[%s278 + $0x20] sm:$0xff] %vm1765, %v1678
        %1771 = vst.msk [vmem:[%s278 + $0x28] sm:$0xff] %vm1765, %v1680
        %1772 = vst.msk [vmem:[%s278 + $0x30] sm:$0xff] %vm1765, %v1682
        %1773 = vst.msk [vmem:[%s278 + $0x38] sm:$0xff] %vm1765, %v1684
        %1774 = vst.msk [vmem:[%s278 + $0x40] sm:$0xff] %vm1765, %v1686
        %1775 = vst.msk [vmem:[%s278 + $0x48] sm:$0xff] %vm1765, %v1688
        %1776 = vst.msk [vmem:[%s278 + $0x50] sm:$0xff] %vm1765, %v1690
        %1777 = vst.msk [vmem:[%s278 + $0x58] sm:$0xff] %vm1765, %v1692
        %1778 = vst.msk [vmem:[%s278 + $0x60] sm:$0xff] %vm1765, %v1694
        %1779 = vst.msk [vmem:[%s278 + $0x68] sm:$0xff] %vm1765, %v1696
        %1780 = vst.msk [vmem:[%s278 + $0x70] sm:$0xff] %vm1765, %v1698
        %1781 = vst.msk [vmem:[%s278 + $0x78] sm:$0xff] %vm1765, %v1700
        %1782 = vst.msk [vmem:[%s278 + $0x80] sm:$0xff] %vm1765, %v1702
        %1783 = vst.msk [vmem:[%s278 + $0x88] sm:$0xff] %vm1765, %v1704
        %1784 = vst.msk [vmem:[%s278 + $0x90] sm:$0xff] %vm1765, %v1706
        %1785 = vst.msk [vmem:[%s278 + $0x98] sm:$0xff] %vm1765, %v1708
        %1786 = vst.msk [vmem:[%s278 + $0xa0] sm:$0xff] %vm1765, %v1710
        %1787 = vst.msk [vmem:[%s278 + $0xa8] sm:$0xff] %vm1765, %v1712
        %1788 = vst.msk [vmem:[%s278 + $0xb0] sm:$0xff] %vm1765, %v1714
        %1789 = vst.msk [vmem:[%s278 + $0xb8] sm:$0xff] %vm1765, %v1716
        %1790 = vst.msk [vmem:[%s278 + $0xc0] sm:$0xff] %vm1765, %v1718
        %1791 = vst.msk [vmem:[%s278 + $0xc8] sm:$0xff] %vm1765, %v1720
        %1792 = vst.msk [vmem:[%s278 + $0xd0] sm:$0xff] %vm1765, %v1722
        %1793 = vst.msk [vmem:[%s278 + $0xd8] sm:$0xff] %vm1765, %v1724
        %1794 = vst.msk [vmem:[%s278 + $0xe0] sm:$0xff] %vm1765, %v1726
        %1795 = vst.msk [vmem:[%s278 + $0xe8] sm:$0xff] %vm1765, %v1728
        %1796 = vst.msk [vmem:[%s278 + $0xf0] sm:$0xff] %vm1765, %v1730
        %1797 = vst.msk [vmem:[%s278 + $0xf8] sm:$0xff] %vm1765, %v1732
        %1830 = vrot.lane.b32.xlu0 %v1413, 96
        %v1831 = vpop.permute.xlu0 %1830
        %1832 = vrot.lane.b32.xlu0 %v1414, 96
        %v1833 = vpop.permute.xlu0 %1832
        %1834 = vrot.lane.b32.xlu0 %v1415, 96
        %v1835 = vpop.permute.xlu0 %1834
        %1836 = vrot.lane.b32.xlu0 %v1416, 96
        %v1837 = vpop.permute.xlu0 %1836
        %1838 = vrot.lane.b32.xlu0 %v1417, 96
        %v1839 = vpop.permute.xlu0 %1838
        %1840 = vrot.lane.b32.xlu0 %v1418, 96
        %v1841 = vpop.permute.xlu0 %1840
        %1842 = vrot.lane.b32.xlu0 %v1419, 96
        %v1843 = vpop.permute.xlu0 %1842
        %1844 = vrot.lane.b32.xlu0 %v1420, 96
        %v1845 = vpop.permute.xlu0 %1844
        %1846 = vrot.lane.b32.xlu0 %v1421, 96
        %v1847 = vpop.permute.xlu0 %1846
        %1848 = vrot.lane.b32.xlu0 %v1422, 96
        %v1849 = vpop.permute.xlu0 %1848
        %1850 = vrot.lane.b32.xlu0 %v1423, 96
        %v1851 = vpop.permute.xlu0 %1850
        %1852 = vrot.lane.b32.xlu0 %v1424, 96
        %v1853 = vpop.permute.xlu0 %1852
        %1854 = vrot.lane.b32.xlu0 %v1425, 96
        %v1855 = vpop.permute.xlu0 %1854
        %1856 = vrot.lane.b32.xlu0 %v1426, 96
        %v1857 = vpop.permute.xlu0 %1856
        %1858 = vrot.lane.b32.xlu0 %v1427, 96
        %v1859 = vpop.permute.xlu0 %1858
        %1860 = vrot.lane.b32.xlu0 %v1428, 96
        %v1861 = vpop.permute.xlu0 %1860
        %1862 = vrot.lane.b32.xlu0 %v1429, 96
        %v1863 = vpop.permute.xlu0 %1862
        %1864 = vrot.lane.b32.xlu0 %v1430, 96
        %v1865 = vpop.permute.xlu0 %1864
        %1866 = vrot.lane.b32.xlu0 %v1431, 96
        %v1867 = vpop.permute.xlu0 %1866
        %1868 = vrot.lane.b32.xlu0 %v1432, 96
        %v1869 = vpop.permute.xlu0 %1868
        %1870 = vrot.lane.b32.xlu0 %v1433, 96
        %v1871 = vpop.permute.xlu0 %1870
        %1872 = vrot.lane.b32.xlu0 %v1434, 96
        %v1873 = vpop.permute.xlu0 %1872
        %1874 = vrot.lane.b32.xlu0 %v1435, 96
        %v1875 = vpop.permute.xlu0 %1874
        %1876 = vrot.lane.b32.xlu0 %v1436, 96
        %v1877 = vpop.permute.xlu0 %1876
        %1878 = vrot.lane.b32.xlu0 %v1437, 96
        %v1879 = vpop.permute.xlu0 %1878
        %1880 = vrot.lane.b32.xlu0 %v1438, 96
        %v1881 = vpop.permute.xlu0 %1880
        %1882 = vrot.lane.b32.xlu0 %v1439, 96
        %v1883 = vpop.permute.xlu0 %1882
        %1884 = vrot.lane.b32.xlu0 %v1440, 96
        %v1885 = vpop.permute.xlu0 %1884
        %1886 = vrot.lane.b32.xlu0 %v1441, 96
        %v1887 = vpop.permute.xlu0 %1886
        %1888 = vrot.lane.b32.xlu0 %v1442, 96
        %v1889 = vpop.permute.xlu0 %1888
        %1890 = vrot.lane.b32.xlu0 %v1443, 96
        %v1891 = vpop.permute.xlu0 %1890
        %1892 = vrot.lane.b32.xlu0 %v1444, 96
        %v1893 = vpop.permute.xlu0 %1892
        %1926 = vst.msk [vmem:[%s284] sm:$0xff] %vm1765, %v1831
        %1927 = vst.msk [vmem:[%s284 + $0x8] sm:$0xff] %vm1765, %v1833
        %1928 = vst.msk [vmem:[%s284 + $0x10] sm:$0xff] %vm1765, %v1835
        %1929 = vst.msk [vmem:[%s284 + $0x18] sm:$0xff] %vm1765, %v1837
        %1930 = vst.msk [vmem:[%s284 + $0x20] sm:$0xff] %vm1765, %v1839
        %1931 = vst.msk [vmem:[%s284 + $0x28] sm:$0xff] %vm1765, %v1841
        %1932 = vst.msk [vmem:[%s284 + $0x30] sm:$0xff] %vm1765, %v1843
        %1933 = vst.msk [vmem:[%s284 + $0x38] sm:$0xff] %vm1765, %v1845
        %1934 = vst.msk [vmem:[%s284 + $0x40] sm:$0xff] %vm1765, %v1847
        %1935 = vst.msk [vmem:[%s284 + $0x48] sm:$0xff] %vm1765, %v1849
        %1936 = vst.msk [vmem:[%s284 + $0x50] sm:$0xff] %vm1765, %v1851
        %1937 = vst.msk [vmem:[%s284 + $0x58] sm:$0xff] %vm1765, %v1853
        %1938 = vst.msk [vmem:[%s284 + $0x60] sm:$0xff] %vm1765, %v1855
        %1939 = vst.msk [vmem:[%s284 + $0x68] sm:$0xff] %vm1765, %v1857
        %1940 = vst.msk [vmem:[%s284 + $0x70] sm:$0xff] %vm1765, %v1859
        %1941 = vst.msk [vmem:[%s284 + $0x78] sm:$0xff] %vm1765, %v1861
        %1942 = vst.msk [vmem:[%s284 + $0x80] sm:$0xff] %vm1765, %v1863
        %1943 = vst.msk [vmem:[%s284 + $0x88] sm:$0xff] %vm1765, %v1865
        %1944 = vst.msk [vmem:[%s284 + $0x90] sm:$0xff] %vm1765, %v1867
        %1945 = vst.msk [vmem:[%s284 + $0x98] sm:$0xff] %vm1765, %v1869
        %1946 = vst.msk [vmem:[%s284 + $0xa0] sm:$0xff] %vm1765, %v1871
        %1947 = vst.msk [vmem:[%s284 + $0xa8] sm:$0xff] %vm1765, %v1873
        %1948 = vst.msk [vmem:[%s284 + $0xb0] sm:$0xff] %vm1765, %v1875
        %1949 = vst.msk [vmem:[%s284 + $0xb8] sm:$0xff] %vm1765, %v1877
        %1950 = vst.msk [vmem:[%s284 + $0xc0] sm:$0xff] %vm1765, %v1879
        %1951 = vst.msk [vmem:[%s284 + $0xc8] sm:$0xff] %vm1765, %v1881
        %1952 = vst.msk [vmem:[%s284 + $0xd0] sm:$0xff] %vm1765, %v1883
        %1953 = vst.msk [vmem:[%s284 + $0xd8] sm:$0xff] %vm1765, %v1885
        %1954 = vst.msk [vmem:[%s284 + $0xe0] sm:$0xff] %vm1765, %v1887
        %1955 = vst.msk [vmem:[%s284 + $0xe8] sm:$0xff] %vm1765, %v1889
        %1956 = vst.msk [vmem:[%s284 + $0xf0] sm:$0xff] %vm1765, %v1891
        %1957 = vst.msk [vmem:[%s284 + $0xf8] sm:$0xff] %vm1765, %v1893
        %s1958 = smul.u32 32, %s20
        %p1959 = scmp.lt.s32.totalorder %s1958, 63
        %s1960 = scalar_select %p1959, %s1958, 63
        %s1961 = smul.addr %s1960, 8
        %s1962 = scalar_lea.vmem %s4, %s1961
        %s1963 = smul.u32 32, %s20
        %p1964 = scmp.lt.s32.totalorder %s1963, 63
        %s1965 = scalar_select %p1964, %s1963, 63
        %s1966 = smul.addr %s1965, 8
        %s1967 = scalar_lea.vmem %s5, %s1966
        // Predicated region
        $region41: #{tpu_custom_call.1} parent=35 // pred_check
          %p1968 = pneg %p132
        $region42: #{tpu_custom_call.1} parent=35 // pred_check_branch
          %1970 = sbr.rel (%p1968) target = $region44
        $region43: #{tpu_custom_call.1} parent=35 // pred_region
          %s1971 = smul.u32 32, %s20
        $region44: #{tpu_custom_call.1} parent=35 // pred_fallthru
          _
        // Predicated region
        $region45: #{tpu_custom_call.1} parent=35 // pred_check
          %p1972 = pneg %p158
        $region46: #{tpu_custom_call.1} parent=35 // pred_check_branch
          %1974 = sbr.rel (%p1972) target = $region48
        $region47: #{tpu_custom_call.1} parent=35 // pred_region
          %s1975 = smul.u32 32, %s20
        $region48: #{tpu_custom_call.1} parent=35 // pred_fallthru
          _
      $region36: #{tpu_custom_call.1} parent=5 // pred_fallthru
        _
      %p1976 = scmp.le.s32.totalorder 2, %s15
      // Predicated region
      $region49: #{tpu_custom_call.1} parent=5 // pred_check
        %p1977 = pneg %p1976
      $region50: #{tpu_custom_call.1} parent=5 // pred_check_branch
        %1979 = sbr.rel (%p1977) target = $region52
      $region51: #{tpu_custom_call.1} parent=5 // pred_region
        %s1980 = ssub.s32 %s15, 2
        // Predicated region
        $region53: #{tpu_custom_call.1} parent=51 // pred_check
          %p1981 = pneg %p138
        $region54: #{tpu_custom_call.1} parent=51 // pred_check_branch
          %1983 = sbr.rel (%p1981) target = $region56
        $region55: #{tpu_custom_call.1} parent=51 // pred_region
          %s1984 = smul.u32 32, %s21
          %p1985 = scmp.lt.s32.totalorder %s1984, 63
          %s1986 = scalar_select %p1985, %s1984, 63
          %s1987 = smul.addr %s1986, 8
          %s1988 = scalar_lea.vmem %s4, %s1987
        $region56: #{tpu_custom_call.1} parent=51 // pred_fallthru
          _
        // Predicated region
        $region57: #{tpu_custom_call.1} parent=51 // pred_check
          %p1989 = pneg %p164
        $region58: #{tpu_custom_call.1} parent=51 // pred_check_branch
          %1991 = sbr.rel (%p1989) target = $region60
        $region59: #{tpu_custom_call.1} parent=51 // pred_region
          %s1992 = smul.u32 32, %s21
          %p1993 = scmp.lt.s32.totalorder %s1992, 63
          %s1994 = scalar_select %p1993, %s1992, 63
          %s1995 = smul.addr %s1994, 8
          %s1996 = scalar_lea.vmem %s5, %s1995
        $region60: #{tpu_custom_call.1} parent=51 // pred_fallthru
          _
      $region52: #{tpu_custom_call.1} parent=5 // pred_fallthru
        _
    $region6: #{tpu_custom_call.1} parent=1 // loop_footer
      %s19 = sadd.s32 1, %s15
    $region7: #{tpu_custom_call.1} parent=1 // loop_footer_branch
      %14 = sbr.rel target = $region3
    $region8: #{tpu_custom_call.1} parent=1 // loop_exit
      _
    %1997 = vsyncpa [#allocation3], 1
    %s1998 = scalar_lea.sflag [#allocation3], 1
    %1999 = vsyncpa %s1998, 1

</llo_original>
